<compile_context>
chip_gen: v7x
topology: tpu7x:2x2x1
jax: 0.10.0
libtpu: 0.0.40
codegen_flags: <defaults>
</compile_context>

<pallas_src>
import functools

import jax
import jax.numpy as jnp
from jax.experimental import pallas as pl
from jax.experimental.pallas import tpu as pltpu

LN_EPS = 1e-5       # nn.LayerNorm default
NEG_BIG = -1e30     # finite masked-score bias (no NaN risk from exp(-inf - -inf))


def _layer_norm(v, g, b):
    mu = jnp.mean(v, axis=-1, keepdims=True)
    d = v - mu
    var = jnp.mean(d * d, axis=-1, keepdims=True)   # biased variance (torch LayerNorm)
    return d * jax.lax.rsqrt(var + LN_EPS) * g + b


def attention_block_kernel(
    x_ref,
    ln1_g_ref, ln1_b_ref,
    w_qkv_ref, w_out_ref,
    ln2_g_ref, ln2_b_ref,
    w1_ref, b1_ref, w2_ref, b2_ref,
    o_ref,
    *, num_heads, head_size, mlp_chunk,
):
    B_tile, C, E = x_ref.shape
    HS = num_heads * head_size
    N = B_tile * C
    BH = B_tile * num_heads

    # Flatten batch*seq so every dense matmul sees M = B_tile*C rows on the MXU.
    x = x_ref[...].reshape(N, E)                              # f32

    # ---- LayerNorm 1 (f32 elementwise) ----
    h1 = _layer_norm(x, ln1_g_ref[0], ln1_b_ref[0])

    # ---- QKV projection (no bias: attention_bias=False) ----
    # 1/sqrt(head_size) was folded into the Q columns of w_qkv on the host.
    qkv = jnp.dot(h1.astype(jnp.bfloat16), w_qkv_ref[...],
                  preferred_element_type=jnp.float32)         # (N, 3*HS) f32
    qkv = qkv.reshape(B_tile, C, 3 * HS)

    # One relayout per tensor: (B, C, H*hs) -> (B*H, C, hs), heads batched on the MXU.
    def split_heads(sl):
        return (sl.reshape(B_tile, C, num_heads, head_size)
                  .transpose(0, 2, 1, 3)
                  .reshape(BH, C, head_size)
                  .astype(jnp.bfloat16))

    q = split_heads(qkv[:, :, :HS])                           # (BH, C, hs) — q already scaled
    k = split_heads(qkv[:, :, HS:2 * HS])
    v = split_heads(qkv[:, :, 2 * HS:])

    # Batch/head-invariant additive causal bias, built once at (C, C).
    row = jax.lax.broadcasted_iota(jnp.int32, (C, C), 0)
    col = jax.lax.broadcasted_iota(jnp.int32, (C, C), 1)
    causal_bias = jnp.where(col <= row, 0.0, NEG_BIG).astype(jnp.float32)

    # ---- causal self-attention: two dot_generals batched over (batch*head) ----
    s = jnp.einsum('bqd,bkd->bqk', q, k,
                   preferred_element_type=jnp.float32)        # (BH, C, C) f32
    s = s + causal_bias                                       # broadcast over BH
    s = s - jnp.max(s, axis=-1, keepdims=True)
    p = jnp.exp(s)                                            # f32 (v5e has no bf16 VPU/EUP)
    p = p * pl.reciprocal(jnp.sum(p, axis=-1, keepdims=True), approx=True)
    # TODO(synk): long-context configs need a KV grid axis ("arbitrary", last) + online
    # softmax so scores are (BH, Cq_tile, Ck_tile); required for v7x's 64 MiB at large C.
    out = jnp.einsum('bqk,bkd->bqd', p.astype(jnp.bfloat16), v,
                     preferred_element_type=jnp.float32)      # (BH, C, hs) f32

    # Merge heads in registers (no VMEM scratch round-trip): (BH, C, hs) -> (N, HS).
    attn = (out.reshape(B_tile, num_heads, C, head_size)
               .transpose(0, 2, 1, 3)
               .reshape(N, HS))

    # ---- output projection (no bias) + residual (dropout = identity at inference) ----
    proj = jnp.dot(attn.astype(jnp.bfloat16), w_out_ref[...],
                   preferred_element_type=jnp.float32)        # (N, E)
    multi = proj + x

    # ---- LayerNorm 2 + FeedForward (Linear -> ReLU -> Linear), hidden-chunked ----
    h2 = _layer_norm(multi, ln2_g_ref[0], ln2_b_ref[0]).astype(jnp.bfloat16)
    hidden = w1_ref.shape[1]                                  # 4 * E
    chunk = min(mlp_chunk, hidden)
    if hidden % chunk != 0:
        chunk = hidden
    f2 = jnp.zeros((N, E), jnp.float32)
    for lo in range(0, hidden, chunk):                        # bounds the (N, 4E) f1 activation
        f1 = jnp.dot(h2, w1_ref[:, lo:lo + chunk],
                     preferred_element_type=jnp.float32) + b1_ref[0, lo:lo + chunk]
        f1 = jnp.maximum(f1, 0.0)                             # ReLU (ffw_use_gelu=False)
        f2 = f2 + jnp.dot(f1.astype(jnp.bfloat16), w2_ref[lo:lo + chunk, :],
                          preferred_element_type=jnp.float32)
    f2 = f2 + b2_ref[0]

    o_ref[...] = (f2 + multi).reshape(B_tile, C, E).astype(o_ref.dtype)
    # TODO(synk): training-mode dropout (p=0.2) would need pltpu.prng_* masks; omitted (eval semantics).
    # TODO(synk): for real configs pad E to a multiple of 128 so o_ref stores are lane-dense (no vst.msk).


def attention_block(x, params, *, num_heads, head_size, batch_tile=None, mlp_chunk=512):
    B, C, E = x.shape
    (ln1_g, ln1_b, w_qkv, w_out, ln2_g, ln2_b, w1, b1, w2, b2) = params
    HS = num_heads * head_size

    if batch_tile is None:
        # Prefer >=2 grid steps: enables 2-TC sharding on v7x and overlaps the x/o DMAs
        # with compute. (For realistic configs also keep batch_tile*C >= 256.)
        batch_tile = B
        for cand in range(B // 2, 0, -1):
            if B % cand == 0:
                batch_tile = cand
                break
    assert B % batch_tile == 0

    # Fold the 1/sqrt(head_size) softmax scale into the Q columns of w_qkv (zero in-kernel cost).
    scale = 1.0 / (head_size ** 0.5)
    w_qkv = w_qkv.at[:, :HS].multiply(scale)

    # bf16 MXU inputs (f32 accumulation in-kernel); LN params / biases stay f32.
    w_qkv_bf = w_qkv.astype(jnp.bfloat16)
    w_out_bf = w_out.astype(jnp.bfloat16)
    w1_bf = w1.astype(jnp.bfloat16)
    w2_bf = w2.astype(jnp.bfloat16)

    kernel = functools.partial(
        attention_block_kernel, num_heads=num_heads, head_size=head_size,
        mlp_chunk=mlp_chunk)

    def const_spec(arr):
        # Grid-invariant operand: constant index_map + single buffer (no double-buffer
        # VMEM waste — matters most under v7x's 64 MiB per-TC budget).
        nd = arr.ndim
        return pl.BlockSpec(arr.shape, lambda b, _n=nd: (0,) * _n,
                            pipeline_mode=pl.Buffered(1))

    # Explicit scoped-VMEM budget: ~80% of physical, capped at 100 MiB
    # (~100 MiB on v5e/v6e, ~51 MiB on v7x), well above the 16/32 MiB defaults.
    try:
        vmem_cap = pltpu.get_tpu_info().vmem_capacity_bytes
    except Exception:
        vmem_cap = 128 << 20
    vmem_limit = min(int(vmem_cap * 0.8), 100 << 20)

    return pl.pallas_call(
        kernel,
        out_shape=jax.ShapeDtypeStruct((B, C, E), x.dtype),
        grid_spec=pltpu.PrefetchScalarGridSpec(
            num_scalar_prefetch=0,
            grid=(B // batch_tile,),
            in_specs=[
                pl.BlockSpec((batch_tile, C, E), lambda b: (b, 0, 0)),   # x
                const_spec(ln1_g), const_spec(ln1_b),
                const_spec(w_qkv_bf), const_spec(w_out_bf),
                const_spec(ln2_g), const_spec(ln2_b),
                const_spec(w1_bf), const_spec(b1), const_spec(w2_bf), const_spec(b2),
            ],
            out_specs=pl.BlockSpec((batch_tile, C, E), lambda b: (b, 0, 0)),
        ),
        compiler_params=pltpu.CompilerParams(
            dimension_semantics=("parallel",),
            vmem_limit_bytes=vmem_limit),
    )(x, ln1_g, ln1_b, w_qkv_bf, w_out_bf, ln2_g, ln2_b, w1_bf, b1, w2_bf, b2)


# ---------------- pure-JAX reference (mirrors the PyTorch forward) ----------------
def reference(x, params, *, num_heads, head_size):
    (ln1_g, ln1_b, w_qkv, w_out, ln2_g, ln2_b, w1, b1, w2, b2) = params
    B, C, E = x.shape
    HS = num_heads * head_size

    def ln(v, g, b):
        mu = jnp.mean(v, axis=-1, keepdims=True)
        var = jnp.mean((v - mu) ** 2, axis=-1, keepdims=True)
        return (v - mu) / jnp.sqrt(var + LN_EPS) * g[0] + b[0]

    h1 = ln(x, ln1_g, ln1_b)
    qkv = h1 @ w_qkv
    q, k, v = qkv[..., :HS], qkv[..., HS:2 * HS], qkv[..., 2 * HS:]
    q = q.reshape(B, C, num_heads, head_size).transpose(0, 2, 1, 3)
    k = k.reshape(B, C, num_heads, head_size).transpose(0, 2, 1, 3)
    v = v.reshape(B, C, num_heads, head_size).transpose(0, 2, 1, 3)
    s = jnp.einsum('bhqd,bhkd->bhqk', q, k)
    mask = ~jnp.tril(jnp.ones((C, C), dtype=bool))
    s = jnp.where(mask, -jnp.inf, s) * (1.0 / head_size ** 0.5)
    p = jax.nn.softmax(s, axis=-1)
    a = jnp.einsum('bhqk,bhkd->bhqd', p, v)
    a = a.transpose(0, 2, 1, 3).reshape(B, C, HS)
    multi = a @ w_out + x
    h2 = ln(multi, ln2_g, ln2_b)
    f = jnp.maximum(h2 @ w1 + b1[0], 0.0) @ w2 + b2[0]
    return f + multi


if __name__ == "__main__":
    B, C, E = 2, 8, 32          # batch, context length, embedding size
    H, hs = 4, 8                # num_heads, head_size  (H*hs == E)
    HS = H * hs

    key = jax.random.PRNGKey(0)
    keys = jax.random.split(key, 8)

    x = jax.random.normal(keys[0], (B, C, E), jnp.float32)

    # Deterministic synthetic parameters (torch Linear weights stored transposed
    # here as (in_features, out_features)).
    ln1_g = 1.0 + 0.05 * jax.random.normal(keys[1], (1, E), jnp.float32)
    ln1_b = 0.05 * jax.random.normal(keys[2], (1, E), jnp.float32)
    w_qkv = 0.1 * jax.random.normal(keys[3], (E, 3 * HS), jnp.float32)
    w_out = 0.1 * jax.random.normal(keys[4], (HS, E), jnp.float32)
    ln2_g = 1.0 + 0.05 * jax.random.normal(keys[5], (1, E), jnp.float32)
    ln2_b = 0.05 * jax.random.normal(keys[6], (1, E), jnp.float32)
    kk = jax.random.split(keys[7], 4)
    w1 = 0.1 * jax.random.normal(kk[0], (E, 4 * E), jnp.float32)
    b1 = 0.05 * jax.random.normal(kk[1], (1, 4 * E), jnp.float32)
    w2 = 0.1 * jax.random.normal(kk[2], (4 * E, E), jnp.float32)
    b2 = 0.05 * jax.random.normal(kk[3], (1, E), jnp.float32)

    params = (ln1_g, ln1_b, w_qkv, w_out, ln2_g, ln2_b, w1, b1, w2, b2)

    out = attention_block(x, params, num_heads=H, head_size=hs)
    out = jax.block_until_ready(out)

    ref = reference(x, params, num_heads=H, head_size=hs)
    assert out.shape == x.shape
    assert jnp.allclose(out, ref, atol=5e-2, rtol=5e-2), "mismatch vs pure-JAX reference"

    print("KERNEL_OK")
</pallas_src>

<mosaic_0001>
module attributes {stable_mosaic.version = 11 : i64} {
  func.func @attention_block_kernel(%arg0: i32, %arg1: memref<1x8x32xf32, #tpu.memory_space<vmem>>, %arg2: memref<1x32xf32, #tpu.memory_space<vmem>>, %arg3: memref<1x32xf32, #tpu.memory_space<vmem>>, %arg4: memref<32x96xbf16, #tpu.memory_space<vmem>>, %arg5: memref<32x32xbf16, #tpu.memory_space<vmem>>, %arg6: memref<1x32xf32, #tpu.memory_space<vmem>>, %arg7: memref<1x32xf32, #tpu.memory_space<vmem>>, %arg8: memref<32x128xbf16, #tpu.memory_space<vmem>>, %arg9: memref<1x128xf32, #tpu.memory_space<vmem>>, %arg10: memref<128x32xbf16, #tpu.memory_space<vmem>>, %arg11: memref<1x32xf32, #tpu.memory_space<vmem>>, %arg12: memref<1x8x32xf32, #tpu.memory_space<vmem>>) attributes {dimension_semantics = [#tpu.dimension_semantics<parallel>], iteration_bounds = array<i64: 2>, scalar_prefetch = 0 : i64, scratch_operands = 0 : i64, tpu.core_type = #tpu.core_type<tc>, window_params = [{transform_indices = @transform_0, window_bounds = array<i64: 1, 8, 32>}, {pipeline_mode = #tpu.pipeline_mode<synchronous>, transform_indices = @transform_1, window_bounds = array<i64: 1, 32>}, {pipeline_mode = #tpu.pipeline_mode<synchronous>, transform_indices = @transform_2, window_bounds = array<i64: 1, 32>}, {pipeline_mode = #tpu.pipeline_mode<synchronous>, transform_indices = @transform_3, window_bounds = array<i64: 32, 96>}, {pipeline_mode = #tpu.pipeline_mode<synchronous>, transform_indices = @transform_4, window_bounds = array<i64: 32, 32>}, {pipeline_mode = #tpu.pipeline_mode<synchronous>, transform_indices = @transform_5, window_bounds = array<i64: 1, 32>}, {pipeline_mode = #tpu.pipeline_mode<synchronous>, transform_indices = @transform_6, window_bounds = array<i64: 1, 32>}, {pipeline_mode = #tpu.pipeline_mode<synchronous>, transform_indices = @transform_7, window_bounds = array<i64: 32, 128>}, {pipeline_mode = #tpu.pipeline_mode<synchronous>, transform_indices = @transform_8, window_bounds = array<i64: 1, 128>}, {pipeline_mode = #tpu.pipeline_mode<synchronous>, transform_indices = @transform_9, window_bounds = array<i64: 128, 32>}, {pipeline_mode = #tpu.pipeline_mode<synchronous>, transform_indices = @transform_10, window_bounds = array<i64: 1, 32>}, {transform_indices = @transform_11, window_bounds = array<i64: 1, 8, 32>}]} {
    %c0 = arith.constant 0 : index
    %c0_0 = arith.constant 0 : index
    %c0_1 = arith.constant 0 : index
    %0 = vector.load %arg1[%c0, %c0_0, %c0_1] : memref<1x8x32xf32, #tpu.memory_space<vmem>>, vector<1x8x32xf32>
    %1 = vector.shape_cast %0 : vector<1x8x32xf32> to vector<8x32xf32>
    %c0_2 = arith.constant 0 : index
    %c0_3 = arith.constant 0 : index
    %2 = vector.load %arg2[%c0_2, %c0_3] : memref<1x32xf32, #tpu.memory_space<vmem>>, vector<1x32xf32>
    %3 = vector.shape_cast %2 : vector<1x32xf32> to vector<32xf32>
    %c0_4 = arith.constant 0 : index
    %c0_5 = arith.constant 0 : index
    %4 = vector.load %arg3[%c0_4, %c0_5] : memref<1x32xf32, #tpu.memory_space<vmem>>, vector<1x32xf32>
    %5 = vector.shape_cast %4 : vector<1x32xf32> to vector<32xf32>
    %cst = arith.constant dense<0.000000e+00> : vector<8xf32>
    %6 = vector.multi_reduction <add>, %1, %cst [1] : vector<8x32xf32> to vector<8xf32>
    %7 = vector.shape_cast %6 : vector<8xf32> to vector<8x1xf32>
    %cst_6 = arith.constant 3.200000e+01 : f32
    %8 = vector.broadcast %cst_6 : f32 to vector<8x1xf32>
    %9 = arith.divf %7, %8 : vector<8x1xf32>
    %10 = vector.broadcast %9 : vector<8x1xf32> to vector<8x32xf32>
    %11 = arith.subf %1, %10 : vector<8x32xf32>
    %12 = arith.mulf %11, %11 : vector<8x32xf32>
    %cst_7 = arith.constant dense<0.000000e+00> : vector<8xf32>
    %13 = vector.multi_reduction <add>, %12, %cst_7 [1] : vector<8x32xf32> to vector<8xf32>
    %14 = vector.shape_cast %13 : vector<8xf32> to vector<8x1xf32>
    %cst_8 = arith.constant 3.200000e+01 : f32
    %15 = vector.broadcast %cst_8 : f32 to vector<8x1xf32>
    %16 = arith.divf %14, %15 : vector<8x1xf32>
    %cst_9 = arith.constant 9.99999974E-6 : f32
    %17 = vector.broadcast %cst_9 : f32 to vector<8x1xf32>
    %18 = arith.addf %16, %17 : vector<8x1xf32>
    %19 = math.rsqrt %18 : vector<8x1xf32>
    %20 = vector.broadcast %19 : vector<8x1xf32> to vector<8x32xf32>
    %21 = arith.mulf %11, %20 : vector<8x32xf32>
    %22 = vector.shape_cast %3 : vector<32xf32> to vector<1x32xf32>
    %23 = vector.broadcast %22 : vector<1x32xf32> to vector<8x32xf32>
    %24 = arith.mulf %21, %23 : vector<8x32xf32>
    %25 = vector.shape_cast %5 : vector<32xf32> to vector<1x32xf32>
    %26 = vector.broadcast %25 : vector<1x32xf32> to vector<8x32xf32>
    %27 = arith.addf %24, %26 : vector<8x32xf32>
    %28 = arith.truncf %27 : vector<8x32xf32> to vector<8x32xbf16>
    %c0_10 = arith.constant 0 : index
    %c0_11 = arith.constant 0 : index
    %29 = vector.load %arg4[%c0_10, %c0_11] : memref<32x96xbf16, #tpu.memory_space<vmem>>, vector<32x96xbf16>
    %cst_12 = arith.constant dense<0.000000e+00> : vector<8x96xf32>
    %30 = tpu.matmul %28, %29, %cst_12 {dimension_numbers = #tpu.dot_dimension_numbers<[1], [0], [0], [1], [0, 0, 1, 1], [], []>} : vector<8x32xbf16>, vector<32x96xbf16>, vector<8x96xf32> -> vector<8x96xf32>
    %31 = vector.shape_cast %30 : vector<8x96xf32> to vector<1x8x96xf32>
    %32 = vector.extract_strided_slice %31 {offsets = [0, 0, 0], sizes = [1, 8, 32], strides = [1, 1, 1]} : vector<1x8x96xf32> to vector<1x8x32xf32>
    %33 = vector.shape_cast %32 : vector<1x8x32xf32> to vector<1x8x4x8xf32>
    %34 = tpu.transpose %33, [0, 2, 1, 3] : vector<1x8x4x8xf32> -> vector<1x4x8x8xf32>
    %35 = vector.shape_cast %34 : vector<1x4x8x8xf32> to vector<4x8x8xf32>
    %36 = arith.truncf %35 : vector<4x8x8xf32> to vector<4x8x8xbf16>
    %37 = vector.extract_strided_slice %31 {offsets = [0, 0, 32], sizes = [1, 8, 32], strides = [1, 1, 1]} : vector<1x8x96xf32> to vector<1x8x32xf32>
    %38 = vector.shape_cast %37 : vector<1x8x32xf32> to vector<1x8x4x8xf32>
    %39 = tpu.transpose %38, [0, 2, 1, 3] : vector<1x8x4x8xf32> -> vector<1x4x8x8xf32>
    %40 = vector.shape_cast %39 : vector<1x4x8x8xf32> to vector<4x8x8xf32>
    %41 = arith.truncf %40 : vector<4x8x8xf32> to vector<4x8x8xbf16>
    %42 = vector.extract_strided_slice %31 {offsets = [0, 0, 64], sizes = [1, 8, 32], strides = [1, 1, 1]} : vector<1x8x96xf32> to vector<1x8x32xf32>
    %43 = vector.shape_cast %42 : vector<1x8x32xf32> to vector<1x8x4x8xf32>
    %44 = tpu.transpose %43, [0, 2, 1, 3] : vector<1x8x4x8xf32> -> vector<1x4x8x8xf32>
    %45 = vector.shape_cast %44 : vector<1x4x8x8xf32> to vector<4x8x8xf32>
    %46 = arith.truncf %45 : vector<4x8x8xf32> to vector<4x8x8xbf16>
    %47 = tpu.iota {dimensions = array<i32: 0>} : vector<8x8xi32>
    %48 = tpu.iota {dimensions = array<i32: 1>} : vector<8x8xi32>
    %49 = arith.cmpi sle, %48, %47 : vector<8x8xi32>
    %cst_13 = arith.constant 0.000000e+00 : f32
    %cst_14 = arith.constant -1.000000e+30 : f32
    %50 = vector.broadcast %cst_13 : f32 to vector<8x8xf32>
    %51 = vector.broadcast %cst_14 : f32 to vector<8x8xf32>
    %52 = arith.select %49, %50, %51 : vector<8x8xi1>, vector<8x8xf32>
    "tpu.trace_start"() <{level = 10 : i32, message = "bqd,bkd->bqk"}> : () -> ()
    %cst_15 = arith.constant dense<0.000000e+00> : vector<4x8x8xf32>
    %53 = tpu.matmul %36, %41, %cst_15 {dimension_numbers = #tpu.dot_dimension_numbers<[2], [2], [1], [1], [0, 0, 0, 1, 1, 1], [0], [0]>} : vector<4x8x8xbf16>, vector<4x8x8xbf16>, vector<4x8x8xf32> -> vector<4x8x8xf32>
    "tpu.trace_stop"() : () -> ()
    %54 = vector.shape_cast %52 : vector<8x8xf32> to vector<1x8x8xf32>
    %55 = vector.broadcast %54 : vector<1x8x8xf32> to vector<4x8x8xf32>
    %56 = arith.addf %53, %55 : vector<4x8x8xf32>
    %cst_16 = arith.constant dense<0xFF800000> : vector<4x8xf32>
    %57 = vector.multi_reduction <maximumf>, %56, %cst_16 [2] : vector<4x8x8xf32> to vector<4x8xf32>
    %58 = vector.shape_cast %57 : vector<4x8xf32> to vector<4x8x1xf32>
    %59 = vector.broadcast %58 : vector<4x8x1xf32> to vector<4x8x8xf32>
    %60 = arith.subf %56, %59 : vector<4x8x8xf32>
    %61 = math.exp %60 : vector<4x8x8xf32>
    %cst_17 = arith.constant dense<0.000000e+00> : vector<4x8xf32>
    %62 = vector.multi_reduction <add>, %61, %cst_17 [2] : vector<4x8x8xf32> to vector<4x8xf32>
    %63 = vector.shape_cast %62 : vector<4x8xf32> to vector<4x8x1xf32>
    %64 = tpu.reciprocal %63 {approx = true} : vector<4x8x1xf32> -> vector<4x8x1xf32>
    %65 = vector.broadcast %64 : vector<4x8x1xf32> to vector<4x8x8xf32>
    %66 = arith.mulf %61, %65 : vector<4x8x8xf32>
    %67 = arith.truncf %66 : vector<4x8x8xf32> to vector<4x8x8xbf16>
    "tpu.trace_start"() <{level = 10 : i32, message = "bqk,bkd->bqd"}> : () -> ()
    %cst_18 = arith.constant dense<0.000000e+00> : vector<4x8x8xf32>
    %68 = tpu.matmul %67, %46, %cst_18 {dimension_numbers = #tpu.dot_dimension_numbers<[2], [1], [1], [2], [0, 0, 0, 1, 1, 2], [0], [0]>} : vector<4x8x8xbf16>, vector<4x8x8xbf16>, vector<4x8x8xf32> -> vector<4x8x8xf32>
    "tpu.trace_stop"() : () -> ()
    %69 = vector.shape_cast %68 : vector<4x8x8xf32> to vector<1x4x8x8xf32>
    %70 = tpu.transpose %69, [0, 2, 1, 3] : vector<1x4x8x8xf32> -> vector<1x8x4x8xf32>
    %71 = vector.shape_cast %70 : vector<1x8x4x8xf32> to vector<8x32xf32>
    %72 = arith.truncf %71 : vector<8x32xf32> to vector<8x32xbf16>
    %c0_19 = arith.constant 0 : index
    %c0_20 = arith.constant 0 : index
    %73 = vector.load %arg5[%c0_19, %c0_20] : memref<32x32xbf16, #tpu.memory_space<vmem>>, vector<32x32xbf16>
    %cst_21 = arith.constant dense<0.000000e+00> : vector<8x32xf32>
    %74 = tpu.matmul %72, %73, %cst_21 {dimension_numbers = #tpu.dot_dimension_numbers<[1], [0], [0], [1], [0, 0, 1, 1], [], []>} : vector<8x32xbf16>, vector<32x32xbf16>, vector<8x32xf32> -> vector<8x32xf32>
    %75 = arith.addf %74, %1 : vector<8x32xf32>
    %c0_22 = arith.constant 0 : index
    %c0_23 = arith.constant 0 : index
    %76 = vector.load %arg6[%c0_22, %c0_23] : memref<1x32xf32, #tpu.memory_space<vmem>>, vector<1x32xf32>
    %77 = vector.shape_cast %76 : vector<1x32xf32> to vector<32xf32>
    %c0_24 = arith.constant 0 : index
    %c0_25 = arith.constant 0 : index
    %78 = vector.load %arg7[%c0_24, %c0_25] : memref<1x32xf32, #tpu.memory_space<vmem>>, vector<1x32xf32>
    %79 = vector.shape_cast %78 : vector<1x32xf32> to vector<32xf32>
    %cst_26 = arith.constant dense<0.000000e+00> : vector<8xf32>
    %80 = vector.multi_reduction <add>, %75, %cst_26 [1] : vector<8x32xf32> to vector<8xf32>
    %81 = vector.shape_cast %80 : vector<8xf32> to vector<8x1xf32>
    %cst_27 = arith.constant 3.200000e+01 : f32
    %82 = vector.broadcast %cst_27 : f32 to vector<8x1xf32>
    %83 = arith.divf %81, %82 : vector<8x1xf32>
    %84 = vector.broadcast %83 : vector<8x1xf32> to vector<8x32xf32>
    %85 = arith.subf %75, %84 : vector<8x32xf32>
    %86 = arith.mulf %85, %85 : vector<8x32xf32>
    %cst_28 = arith.constant dense<0.000000e+00> : vector<8xf32>
    %87 = vector.multi_reduction <add>, %86, %cst_28 [1] : vector<8x32xf32> to vector<8xf32>
    %88 = vector.shape_cast %87 : vector<8xf32> to vector<8x1xf32>
    %cst_29 = arith.constant 3.200000e+01 : f32
    %89 = vector.broadcast %cst_29 : f32 to vector<8x1xf32>
    %90 = arith.divf %88, %89 : vector<8x1xf32>
    %cst_30 = arith.constant 9.99999974E-6 : f32
    %91 = vector.broadcast %cst_30 : f32 to vector<8x1xf32>
    %92 = arith.addf %90, %91 : vector<8x1xf32>
    %93 = math.rsqrt %92 : vector<8x1xf32>
    %94 = vector.broadcast %93 : vector<8x1xf32> to vector<8x32xf32>
    %95 = arith.mulf %85, %94 : vector<8x32xf32>
    %96 = vector.shape_cast %77 : vector<32xf32> to vector<1x32xf32>
    %97 = vector.broadcast %96 : vector<1x32xf32> to vector<8x32xf32>
    %98 = arith.mulf %95, %97 : vector<8x32xf32>
    %99 = vector.shape_cast %79 : vector<32xf32> to vector<1x32xf32>
    %100 = vector.broadcast %99 : vector<1x32xf32> to vector<8x32xf32>
    %101 = arith.addf %98, %100 : vector<8x32xf32>
    %102 = arith.truncf %101 : vector<8x32xf32> to vector<8x32xbf16>
    %cst_31 = arith.constant 0.000000e+00 : f32
    %103 = vector.broadcast %cst_31 : f32 to vector<8x32xf32>
    %c0_32 = arith.constant 0 : index
    %c0_33 = arith.constant 0 : index
    %104 = vector.load %arg8[%c0_32, %c0_33] : memref<32x128xbf16, #tpu.memory_space<vmem>>, vector<32x128xbf16>
    %cst_34 = arith.constant dense<0.000000e+00> : vector<8x128xf32>
    %105 = tpu.matmul %102, %104, %cst_34 {dimension_numbers = #tpu.dot_dimension_numbers<[1], [0], [0], [1], [0, 0, 1, 1], [], []>} : vector<8x32xbf16>, vector<32x128xbf16>, vector<8x128xf32> -> vector<8x128xf32>
    %c0_35 = arith.constant 0 : index
    %c0_36 = arith.constant 0 : index
    %106 = vector.load %arg9[%c0_35, %c0_36] : memref<1x128xf32, #tpu.memory_space<vmem>>, vector<1x128xf32>
    %107 = vector.shape_cast %106 : vector<1x128xf32> to vector<128xf32>
    %108 = vector.shape_cast %107 : vector<128xf32> to vector<1x128xf32>
    %109 = vector.broadcast %108 : vector<1x128xf32> to vector<8x128xf32>
    %110 = arith.addf %105, %109 : vector<8x128xf32>
    %cst_37 = arith.constant 0.000000e+00 : f32
    %111 = vector.broadcast %cst_37 : f32 to vector<8x128xf32>
    %112 = arith.maximumf %110, %111 : vector<8x128xf32>
    %113 = arith.truncf %112 : vector<8x128xf32> to vector<8x128xbf16>
    %c0_38 = arith.constant 0 : index
    %c0_39 = arith.constant 0 : index
    %114 = vector.load %arg10[%c0_38, %c0_39] : memref<128x32xbf16, #tpu.memory_space<vmem>>, vector<128x32xbf16>
    %cst_40 = arith.constant dense<0.000000e+00> : vector<8x32xf32>
    %115 = tpu.matmul %113, %114, %cst_40 {dimension_numbers = #tpu.dot_dimension_numbers<[1], [0], [0], [1], [0, 0, 1, 1], [], []>} : vector<8x128xbf16>, vector<128x32xbf16>, vector<8x32xf32> -> vector<8x32xf32>
    %116 = arith.addf %103, %115 : vector<8x32xf32>
    %c0_41 = arith.constant 0 : index
    %c0_42 = arith.constant 0 : index
    %117 = vector.load %arg11[%c0_41, %c0_42] : memref<1x32xf32, #tpu.memory_space<vmem>>, vector<1x32xf32>
    %118 = vector.shape_cast %117 : vector<1x32xf32> to vector<32xf32>
    %119 = vector.shape_cast %118 : vector<32xf32> to vector<1x32xf32>
    %120 = vector.broadcast %119 : vector<1x32xf32> to vector<8x32xf32>
    %121 = arith.addf %116, %120 : vector<8x32xf32>
    %122 = arith.addf %121, %75 : vector<8x32xf32>
    %123 = vector.shape_cast %122 : vector<8x32xf32> to vector<1x8x32xf32>
    %c0_43 = arith.constant 0 : index
    %c0_44 = arith.constant 0 : index
    %c0_45 = arith.constant 0 : index
    %124 = vector.load %arg12[%c0_43, %c0_44, %c0_45] : memref<1x8x32xf32, #tpu.memory_space<vmem>>, vector<1x8x32xf32>
    tpu.vector_store %arg12[%c0_43, %c0_44, %c0_45], %123 {strides = array<i32>} : memref<1x8x32xf32, #tpu.memory_space<vmem>>, vector<1x8x32xf32>,
    return
  }
  func.func @transform_0(%arg0: i32) -> (i32, i32, i32) {
    %c0_i32 = arith.constant 0 : i32
    %c0_i32_0 = arith.constant 0 : i32
    %c0_i32_1 = arith.constant 0 : i32
    return %arg0, %c0_i32, %c0_i32_0 : i32, i32, i32
  }
  func.func @transform_1(%arg0: i32) -> (i32, i32) {
    %c0_i32 = arith.constant 0 : i32
    %c0_i32_0 = arith.constant 0 : i32
    %c0_i32_1 = arith.constant 0 : i32
    return %c0_i32, %c0_i32_0 : i32, i32
  }
  func.func @transform_2(%arg0: i32) -> (i32, i32) {
    %c0_i32 = arith.constant 0 : i32
    %c0_i32_0 = arith.constant 0 : i32
    %c0_i32_1 = arith.constant 0 : i32
    return %c0_i32, %c0_i32_0 : i32, i32
  }
  func.func @transform_3(%arg0: i32) -> (i32, i32) {
    %c0_i32 = arith.constant 0 : i32
    %c0_i32_0 = arith.constant 0 : i32
    %c0_i32_1 = arith.constant 0 : i32
    return %c0_i32, %c0_i32_0 : i32, i32
  }
  func.func @transform_4(%arg0: i32) -> (i32, i32) {
    %c0_i32 = arith.constant 0 : i32
    %c0_i32_0 = arith.constant 0 : i32
    %c0_i32_1 = arith.constant 0 : i32
    return %c0_i32, %c0_i32_0 : i32, i32
  }
  func.func @transform_5(%arg0: i32) -> (i32, i32) {
    %c0_i32 = arith.constant 0 : i32
    %c0_i32_0 = arith.constant 0 : i32
    %c0_i32_1 = arith.constant 0 : i32
    return %c0_i32, %c0_i32_0 : i32, i32
  }
  func.func @transform_6(%arg0: i32) -> (i32, i32) {
    %c0_i32 = arith.constant 0 : i32
    %c0_i32_0 = arith.constant 0 : i32
    %c0_i32_1 = arith.constant 0 : i32
    return %c0_i32, %c0_i32_0 : i32, i32
  }
  func.func @transform_7(%arg0: i32) -> (i32, i32) {
    %c0_i32 = arith.constant 0 : i32
    %c0_i32_0 = arith.constant 0 : i32
    %c0_i32_1 = arith.constant 0 : i32
    return %c0_i32, %c0_i32_0 : i32, i32
  }
  func.func @transform_8(%arg0: i32) -> (i32, i32) {
    %c0_i32 = arith.constant 0 : i32
    %c0_i32_0 = arith.constant 0 : i32
    %c0_i32_1 = arith.constant 0 : i32
    return %c0_i32, %c0_i32_0 : i32, i32
  }
  func.func @transform_9(%arg0: i32) -> (i32, i32) {
    %c0_i32 = arith.constant 0 : i32
    %c0_i32_0 = arith.constant 0 : i32
    %c0_i32_1 = arith.constant 0 : i32
    return %c0_i32, %c0_i32_0 : i32, i32
  }
  func.func @transform_10(%arg0: i32) -> (i32, i32) {
    %c0_i32 = arith.constant 0 : i32
    %c0_i32_0 = arith.constant 0 : i32
    %c0_i32_1 = arith.constant 0 : i32
    return %c0_i32, %c0_i32_0 : i32, i32
  }
  func.func @transform_11(%arg0: i32) -> (i32, i32, i32) {
    %c0_i32 = arith.constant 0 : i32
    %c0_i32_0 = arith.constant 0 : i32
    %c0_i32_1 = arith.constant 0 : i32
    return %arg0, %c0_i32, %c0_i32_0 : i32, i32, i32
  }
}

</mosaic_0001>

<llo_original>
// kernel: tpu_custom_call.1
$region0: #{tpu_custom_call.1}
  #allocation0 [shape = 'u32[]', space=smem, size = 0x4, offset = 0x4, fixed_abs, tag = 'smem constant byte address 0x4 - core index']
  #allocation1 [shape = 'u32[144,128]{1,0:T(1,128)}', space=vmem, size = 0x12000, scoped, tag = 'internal scratch']
  %s0 = inlined_call_operand.hbm [shape: f32[2,8,32], index: 0, kind: input, shape index: {}]
  %s1 = inlined_call_operand.hbm [shape: f32[1,32], index: 1, kind: input, shape index: {}]
  %s2 = inlined_call_operand.hbm [shape: f32[1,32], index: 2, kind: input, shape index: {}]
  %s3 = inlined_call_operand.hbm [shape: bf16[32,96], index: 3, kind: input, shape index: {}]
  %s4 = inlined_call_operand.hbm [shape: bf16[32,32], index: 4, kind: input, shape index: {}]
  %s5 = inlined_call_operand.hbm [shape: f32[1,32], index: 5, kind: input, shape index: {}]
  %s6 = inlined_call_operand.hbm [shape: f32[1,32], index: 6, kind: input, shape index: {}]
  %s7 = inlined_call_operand.hbm [shape: bf16[32,128], index: 7, kind: input, shape index: {}]
  %s8 = inlined_call_operand.hbm [shape: f32[1,128], index: 8, kind: input, shape index: {}]
  %s9 = inlined_call_operand.hbm [shape: bf16[128,32], index: 9, kind: input, shape index: {}]
  %s10 = inlined_call_operand.hbm [shape: f32[1,32], index: 10, kind: input, shape index: {}]
  %s11 = inlined_call_operand.hbm [shape: f32[2,8,32], index: 11, kind: output, shape index: {}]
  %s12 = sld [smem:[#allocation0]]
  $region121: #{tpu_custom_call.1} parent=0
    _
  %s14 = ssub.s32 1, %s12
  %s15 = scalar_select 0, %s14, %s12
  $region1: #{tpu_custom_call.1} parent=0
    #allocation2 [shape = 'u8[8192]{0}', space=vmem, size = 0x2000, scoped, tag = 'input window, operand 0']
    #allocation3 [shape = 's32[2]{0}', space=sflag, size = 0x8, scoped, tag = 'scoped memory for tpu_custom_call.1']
    #allocation4 [shape = 's32[2]{0}', space=sflag, size = 0x8, scoped, tag = 'scoped memory for tpu_custom_call.1']
    #allocation5 [shape = 'u8[512]{0}', space=vmem, size = 0x400, scoped, tag = 'input window, operand 1, single buffered']
    #allocation6 [shape = 's32[1]{0}', space=sflag, size = 0x4, scoped, tag = 'scoped memory for tpu_custom_call.1']
    #allocation7 [shape = 'u8[512]{0}', space=vmem, size = 0x400, scoped, tag = 'input window, operand 2, single buffered']
    #allocation8 [shape = 'u8[8192]{0}', space=vmem, size = 0x2000, scoped, tag = 'input window, operand 3, single buffered']
    #allocation9 [shape = 's32[1]{0}', space=sflag, size = 0x4, scoped, tag = 'scoped memory for tpu_custom_call.1']
    #allocation10 [shape = 'u8[8192]{0}', space=vmem, size = 0x2000, scoped, tag = 'input window, operand 4, single buffered']
    #allocation11 [shape = 'u8[512]{0}', space=vmem, size = 0x400, scoped, tag = 'input window, operand 5, single buffered']
    #allocation12 [shape = 's32[1]{0}', space=sflag, size = 0x4, scoped, tag = 'scoped memory for tpu_custom_call.1']
    #allocation13 [shape = 'u8[512]{0}', space=vmem, size = 0x400, scoped, tag = 'input window, operand 6, single buffered']
    #allocation14 [shape = 'u8[8192]{0}', space=vmem, size = 0x2000, scoped, tag = 'input window, operand 7, single buffered']
    #allocation15 [shape = 's32[1]{0}', space=sflag, size = 0x4, scoped, tag = 'scoped memory for tpu_custom_call.1']
    #allocation16 [shape = 'u8[512]{0}', space=vmem, size = 0x400, scoped, tag = 'input window, operand 8, single buffered']
    #allocation17 [shape = 'u8[32768]{0}', space=vmem, size = 0x8000, scoped, tag = 'input window, operand 9, single buffered']
    #allocation18 [shape = 's32[1]{0}', space=sflag, size = 0x4, scoped, tag = 'scoped memory for tpu_custom_call.1']
    #allocation19 [shape = 'u8[512]{0}', space=vmem, size = 0x400, scoped, tag = 'input window, operand 10, single buffered']
    #allocation20 [shape = 'u8[8192]{0}', space=vmem, size = 0x2000, scoped, tag = 'output window, operand 0']
    %16 = vsyncpa [#allocation3], 0
    %s17 = scalar_lea.sflag [#allocation3], 1
    %18 = vsyncpa %s17, 0
    %19 = vsyncpa [#allocation6], 0
    %20 = vsyncpa [#allocation9], 0
    %21 = vsyncpa [#allocation12], 0
    %22 = vsyncpa [#allocation15], 0
    %23 = vsyncpa [#allocation18], 0
    %24 = vsyncpa [#allocation4], 0
    %s25 = scalar_lea.sflag [#allocation4], 1
    %26 = vsyncpa %s25, 0
    loop: start=0, step=1, limit=4
    $region2: #{tpu_custom_call.1} parent=1 // loop_pre_header
      _
    $region3: #{tpu_custom_call.1} parent=1 // loop_header
      %s28 = sphi 0, %s32
      %p29 = scmp.ge.s32.totalorder %s28, 4
      %s38 = sphi 0, %s40
      %s41 = sphi 0, %s38
      %s42 = sphi 0, %s41
      %s58 = sphi 0, %s42
      %s62 = sphi 0, %s62
      %s64 = sphi 0, %s62
      %s65 = sphi 0, %s64
      %s79 = sphi 0, %s65
      %s83 = sphi 0, %s83
      %s85 = sphi 0, %s83
      %s86 = sphi 0, %s85
      %s100 = sphi 0, %s86
      %s104 = sphi 0, %s104
      %s106 = sphi 0, %s104
      %s107 = sphi 0, %s106
      %s121 = sphi 0, %s107
      %s125 = sphi 0, %s125
      %s127 = sphi 0, %s125
      %s128 = sphi 0, %s127
      %s142 = sphi 0, %s128
      %s146 = sphi 0, %s146
      %s148 = sphi 0, %s146
      %s149 = sphi 0, %s148
      %s163 = sphi 0, %s149
      %s167 = sphi 0, %s167
      %s169 = sphi 0, %s167
      %s170 = sphi 0, %s169
      %s184 = sphi 0, %s170
      %s188 = sphi 0, %s188
      %s190 = sphi 0, %s188
      %s191 = sphi 0, %s190
      %s205 = sphi 0, %s191
      %s209 = sphi 0, %s209
      %s211 = sphi 0, %s209
      %s212 = sphi 0, %s211
      %s226 = sphi 0, %s212
      %s230 = sphi 0, %s230
      %s232 = sphi 0, %s230
      %s233 = sphi 0, %s232
      %s247 = sphi 0, %s233
      %s251 = sphi 0, %s251
      %s253 = sphi 0, %s251
      %s254 = sphi 0, %s253
      %s268 = sphi 0, %s254
      %s274 = sphi 0, %s276
      %s277 = sphi 0, %s274
      %s278 = sphi 0, %s277
      %s294 = sphi 0, %s278
    $region4: #{tpu_custom_call.1} parent=1 // loop_header_branch
      %31 = sbr.rel (%p29) target = $region8
    $region5: #{tpu_custom_call.1} parent=1 // loop_body
      %s33 = ssub.s32 %s28, 1
      %s34 = ssub.s32 %s28, 2
      %s35 = sadd.s32 %s28, 1
      %s36 = ssub.s32 %s28, %s35
      %p37 = scmp.eq.s32.totalorder %s36, 0
      %s39 = sadd.s32 %s38, 1
      %s40 = scalar_select %p37, %s38, %s39
      %p43 = pneg %p37
      %p44 = scmp.eq.s32.totalorder %s28, 1
      %p45 = por %p43, %p44
      %p46 = scmp.ne.s32.totalorder %s38, %s41
      %p47 = scmp.eq.s32.totalorder %s28, 0
      %p48 = por %p46, %p47
      %p49 = scmp.ne.s32.totalorder %s38, %s41
      %p50 = scmp.eq.s32.totalorder %s33, 1
      %p51 = por %p49, %p50
      %p52 = scmp.ne.s32.totalorder %s41, %s42
      %p53 = scmp.eq.s32.totalorder %s33, 0
      %p54 = por %p52, %p53
      %p55 = scmp.ne.s32.totalorder %s41, %s42
      %p56 = scmp.eq.s32.totalorder %s34, 1
      %p57 = por %p55, %p56
      %p59 = scmp.ne.s32.totalorder %s42, %s58
      %p60 = scmp.eq.s32.totalorder %s34, 0
      %p61 = por %p59, %p60
      %s63 = sadd.s32 %s62, 1
      %p66 = scmp.eq.s32.totalorder %s28, 1
      %p67 = scmp.ne.s32.totalorder %s62, %s64
      %p68 = scmp.eq.s32.totalorder %s28, 0
      %p69 = por %p67, %p68
      %p70 = scmp.ne.s32.totalorder %s62, %s64
      %p71 = scmp.eq.s32.totalorder %s33, 1
      %p72 = por %p70, %p71
      %p73 = scmp.ne.s32.totalorder %s64, %s65
      %p74 = scmp.eq.s32.totalorder %s33, 0
      %p75 = por %p73, %p74
      %p76 = scmp.ne.s32.totalorder %s64, %s65
      %p77 = scmp.eq.s32.totalorder %s34, 1
      %p78 = por %p76, %p77
      %p80 = scmp.ne.s32.totalorder %s65, %s79
      %p81 = scmp.eq.s32.totalorder %s34, 0
      %p82 = por %p80, %p81
      %s84 = sadd.s32 %s83, 1
      %p87 = scmp.eq.s32.totalorder %s28, 1
      %p88 = scmp.ne.s32.totalorder %s83, %s85
      %p89 = scmp.eq.s32.totalorder %s28, 0
      %p90 = por %p88, %p89
      %p91 = scmp.ne.s32.totalorder %s83, %s85
      %p92 = scmp.eq.s32.totalorder %s33, 1
      %p93 = por %p91, %p92
      %p94 = scmp.ne.s32.totalorder %s85, %s86
      %p95 = scmp.eq.s32.totalorder %s33, 0
      %p96 = por %p94, %p95
      %p97 = scmp.ne.s32.totalorder %s85, %s86
      %p98 = scmp.eq.s32.totalorder %s34, 1
      %p99 = por %p97, %p98
      %p101 = scmp.ne.s32.totalorder %s86, %s100
      %p102 = scmp.eq.s32.totalorder %s34, 0
      %p103 = por %p101, %p102
      %s105 = sadd.s32 %s104, 1
      %p108 = scmp.eq.s32.totalorder %s28, 1
      %p109 = scmp.ne.s32.totalorder %s104, %s106
      %p110 = scmp.eq.s32.totalorder %s28, 0
      %p111 = por %p109, %p110
      %p112 = scmp.ne.s32.totalorder %s104, %s106
      %p113 = scmp.eq.s32.totalorder %s33, 1
      %p114 = por %p112, %p113
      %p115 = scmp.ne.s32.totalorder %s106, %s107
      %p116 = scmp.eq.s32.totalorder %s33, 0
      %p117 = por %p115, %p116
      %p118 = scmp.ne.s32.totalorder %s106, %s107
      %p119 = scmp.eq.s32.totalorder %s34, 1
      %p120 = por %p118, %p119
      %p122 = scmp.ne.s32.totalorder %s107, %s121
      %p123 = scmp.eq.s32.totalorder %s34, 0
      %p124 = por %p122, %p123
      %s126 = sadd.s32 %s125, 1
      %p129 = scmp.eq.s32.totalorder %s28, 1
      %p130 = scmp.ne.s32.totalorder %s125, %s127
      %p131 = scmp.eq.s32.totalorder %s28, 0
      %p132 = por %p130, %p131
      %p133 = scmp.ne.s32.totalorder %s125, %s127
      %p134 = scmp.eq.s32.totalorder %s33, 1
      %p135 = por %p133, %p134
      %p136 = scmp.ne.s32.totalorder %s127, %s128
      %p137 = scmp.eq.s32.totalorder %s33, 0
      %p138 = por %p136, %p137
      %p139 = scmp.ne.s32.totalorder %s127, %s128
      %p140 = scmp.eq.s32.totalorder %s34, 1
      %p141 = por %p139, %p140
      %p143 = scmp.ne.s32.totalorder %s128, %s142
      %p144 = scmp.eq.s32.totalorder %s34, 0
      %p145 = por %p143, %p144
      %s147 = sadd.s32 %s146, 1
      %p150 = scmp.eq.s32.totalorder %s28, 1
      %p151 = scmp.ne.s32.totalorder %s146, %s148
      %p152 = scmp.eq.s32.totalorder %s28, 0
      %p153 = por %p151, %p152
      %p154 = scmp.ne.s32.totalorder %s146, %s148
      %p155 = scmp.eq.s32.totalorder %s33, 1
      %p156 = por %p154, %p155
      %p157 = scmp.ne.s32.totalorder %s148, %s149
      %p158 = scmp.eq.s32.totalorder %s33, 0
      %p159 = por %p157, %p158
      %p160 = scmp.ne.s32.totalorder %s148, %s149
      %p161 = scmp.eq.s32.totalorder %s34, 1
      %p162 = por %p160, %p161
      %p164 = scmp.ne.s32.totalorder %s149, %s163
      %p165 = scmp.eq.s32.totalorder %s34, 0
      %p166 = por %p164, %p165
      %s168 = sadd.s32 %s167, 1
      %p171 = scmp.eq.s32.totalorder %s28, 1
      %p172 = scmp.ne.s32.totalorder %s167, %s169
      %p173 = scmp.eq.s32.totalorder %s28, 0
      %p174 = por %p172, %p173
      %p175 = scmp.ne.s32.totalorder %s167, %s169
      %p176 = scmp.eq.s32.totalorder %s33, 1
      %p177 = por %p175, %p176
      %p178 = scmp.ne.s32.totalorder %s169, %s170
      %p179 = scmp.eq.s32.totalorder %s33, 0
      %p180 = por %p178, %p179
      %p181 = scmp.ne.s32.totalorder %s169, %s170
      %p182 = scmp.eq.s32.totalorder %s34, 1
      %p183 = por %p181, %p182
      %p185 = scmp.ne.s32.totalorder %s170, %s184
      %p186 = scmp.eq.s32.totalorder %s34, 0
      %p187 = por %p185, %p186
      %s189 = sadd.s32 %s188, 1
      %p192 = scmp.eq.s32.totalorder %s28, 1
      %p193 = scmp.ne.s32.totalorder %s188, %s190
      %p194 = scmp.eq.s32.totalorder %s28, 0
      %p195 = por %p193, %p194
      %p196 = scmp.ne.s32.totalorder %s188, %s190
      %p197 = scmp.eq.s32.totalorder %s33, 1
      %p198 = por %p196, %p197
      %p199 = scmp.ne.s32.totalorder %s190, %s191
      %p200 = scmp.eq.s32.totalorder %s33, 0
      %p201 = por %p199, %p200
      %p202 = scmp.ne.s32.totalorder %s190, %s191
      %p203 = scmp.eq.s32.totalorder %s34, 1
      %p204 = por %p202, %p203
      %p206 = scmp.ne.s32.totalorder %s191, %s205
      %p207 = scmp.eq.s32.totalorder %s34, 0
      %p208 = por %p206, %p207
      %s210 = sadd.s32 %s209, 1
      %p213 = scmp.eq.s32.totalorder %s28, 1
      %p214 = scmp.ne.s32.totalorder %s209, %s211
      %p215 = scmp.eq.s32.totalorder %s28, 0
      %p216 = por %p214, %p215
      %p217 = scmp.ne.s32.totalorder %s209, %s211
      %p218 = scmp.eq.s32.totalorder %s33, 1
      %p219 = por %p217, %p218
      %p220 = scmp.ne.s32.totalorder %s211, %s212
      %p221 = scmp.eq.s32.totalorder %s33, 0
      %p222 = por %p220, %p221
      %p223 = scmp.ne.s32.totalorder %s211, %s212
      %p224 = scmp.eq.s32.totalorder %s34, 1
      %p225 = por %p223, %p224
      %p227 = scmp.ne.s32.totalorder %s212, %s226
      %p228 = scmp.eq.s32.totalorder %s34, 0
      %p229 = por %p227, %p228
      %s231 = sadd.s32 %s230, 1
      %p234 = scmp.eq.s32.totalorder %s28, 1
      %p235 = scmp.ne.s32.totalorder %s230, %s232
      %p236 = scmp.eq.s32.totalorder %s28, 0
      %p237 = por %p235, %p236
      %p238 = scmp.ne.s32.totalorder %s230, %s232
      %p239 = scmp.eq.s32.totalorder %s33, 1
      %p240 = por %p238, %p239
      %p241 = scmp.ne.s32.totalorder %s232, %s233
      %p242 = scmp.eq.s32.totalorder %s33, 0
      %p243 = por %p241, %p242
      %p244 = scmp.ne.s32.totalorder %s232, %s233
      %p245 = scmp.eq.s32.totalorder %s34, 1
      %p246 = por %p244, %p245
      %p248 = scmp.ne.s32.totalorder %s233, %s247
      %p249 = scmp.eq.s32.totalorder %s34, 0
      %p250 = por %p248, %p249
      %s252 = sadd.s32 %s251, 1
      %p255 = scmp.eq.s32.totalorder %s28, 1
      %p256 = scmp.ne.s32.totalorder %s251, %s253
      %p257 = scmp.eq.s32.totalorder %s28, 0
      %p258 = por %p256, %p257
      %p259 = scmp.ne.s32.totalorder %s251, %s253
      %p260 = scmp.eq.s32.totalorder %s33, 1
      %p261 = por %p259, %p260
      %p262 = scmp.ne.s32.totalorder %s253, %s254
      %p263 = scmp.eq.s32.totalorder %s33, 0
      %p264 = por %p262, %p263
      %p265 = scmp.ne.s32.totalorder %s253, %s254
      %p266 = scmp.eq.s32.totalorder %s34, 1
      %p267 = por %p265, %p266
      %p269 = scmp.ne.s32.totalorder %s254, %s268
      %p270 = scmp.eq.s32.totalorder %s34, 0
      %p271 = por %p269, %p270
      %s272 = ssub.s32 %s28, %s35
      %p273 = scmp.eq.s32.totalorder %s272, 0
      %s275 = sadd.s32 %s274, 1
      %s276 = scalar_select %p273, %s274, %s275
      %p279 = pneg %p273
      %p280 = scmp.eq.s32.totalorder %s28, 1
      %p281 = por %p279, %p280
      %p282 = scmp.ne.s32.totalorder %s274, %s277
      %p283 = scmp.eq.s32.totalorder %s28, 0
      %p284 = por %p282, %p283
      %p285 = scmp.ne.s32.totalorder %s274, %s277
      %p286 = scmp.eq.s32.totalorder %s33, 1
      %p287 = por %p285, %p286
      %p288 = scmp.ne.s32.totalorder %s277, %s278
      %p289 = scmp.eq.s32.totalorder %s33, 0
      %p290 = por %p288, %p289
      %p291 = scmp.ne.s32.totalorder %s277, %s278
      %p292 = scmp.eq.s32.totalorder %s34, 1
      %p293 = por %p291, %p292
      %p295 = scmp.ne.s32.totalorder %s278, %s294
      %p296 = scmp.eq.s32.totalorder %s34, 0
      %p297 = por %p295, %p296
      %p298 = scmp.le.s32.totalorder 1, %s28
      %p299 = scmp.lt.s32.totalorder %s28, 3
      %p300 = pnand %p298, %p299
      %p301 = pneg %p300
      // Predicated region
      $region9: #{tpu_custom_call.1} parent=5 // pred_check
        _
      $region10: #{tpu_custom_call.1} parent=5 // pred_check_branch
        %303 = sbr.rel (%p300) target = $region12
      $region11: #{tpu_custom_call.1} parent=5 // pred_region
        %s304 = ssub.s32 %s28, 1
        // Predicated region
        $region13: #{tpu_custom_call.1} parent=11 // pred_check
          %p305 = pneg %p75
        $region14: #{tpu_custom_call.1} parent=11 // pred_check_branch
          %307 = sbr.rel (%p305) target = $region16
        $region15: #{tpu_custom_call.1} parent=11 // pred_region
          %s309 = ssub.s32 16, 16
          %310 = vsyncadd [#allocation6], %s309
          %s312 = sshll.u32 [#allocation5], 4
          %s313 = int_to_ptr.vmem [resolvable:$true] %s312
          %315 = dma.hbm_to_vmem [thread:$0]  %s1, 16, %s313, [#allocation6]
        $region16: #{tpu_custom_call.1} parent=11 // pred_fallthru
          _
        // Predicated region
        $region17: #{tpu_custom_call.1} parent=11 // pred_check
          %p316 = pneg %p96
        $region18: #{tpu_custom_call.1} parent=11 // pred_check_branch
          %318 = sbr.rel (%p316) target = $region20
        $region19: #{tpu_custom_call.1} parent=11 // pred_region
          %s320 = ssub.s32 16, 16
          %321 = vsyncadd [#allocation6], %s320
          %s323 = sshll.u32 [#allocation7], 4
          %s324 = int_to_ptr.vmem [resolvable:$true] %s323
          %326 = dma.hbm_to_vmem [thread:$0]  %s2, 16, %s324, [#allocation6]
        $region20: #{tpu_custom_call.1} parent=11 // pred_fallthru
          _
        // Predicated region
        $region21: #{tpu_custom_call.1} parent=11 // pred_check
          %p327 = pneg %p117
        $region22: #{tpu_custom_call.1} parent=11 // pred_check_branch
          %329 = sbr.rel (%p327) target = $region24
        $region23: #{tpu_custom_call.1} parent=11 // pred_region
          %s331 = ssub.s32 256, 256
          %332 = vsyncadd [#allocation9], %s331
          %s333 = sshll.u32 [#allocation8], 4
          %s334 = int_to_ptr.vmem [resolvable:$true] %s333
          %339 = dma.hbm_to_vmem [thread:$0]  %s3, 256, %s334, [#allocation9], 64, 64, 4
        $region24: #{tpu_custom_call.1} parent=11 // pred_fallthru
          _
        // Predicated region
        $region25: #{tpu_custom_call.1} parent=11 // pred_check
          %p340 = pneg %p138
        $region26: #{tpu_custom_call.1} parent=11 // pred_check_branch
          %342 = sbr.rel (%p340) target = $region28
        $region27: #{tpu_custom_call.1} parent=11 // pred_region
          %s344 = ssub.s32 256, 256
          %345 = vsyncadd [#allocation9], %s344
          %s346 = sshll.u32 [#allocation10], 4
          %s347 = int_to_ptr.vmem [resolvable:$true] %s346
          %352 = dma.hbm_to_vmem [thread:$0]  %s4, 256, %s347, [#allocation9], 64, 64, 4
        $region28: #{tpu_custom_call.1} parent=11 // pred_fallthru
          _
        // Predicated region
        $region29: #{tpu_custom_call.1} parent=11 // pred_check
          %p353 = pneg %p159
        $region30: #{tpu_custom_call.1} parent=11 // pred_check_branch
          %355 = sbr.rel (%p353) target = $region32
        $region31: #{tpu_custom_call.1} parent=11 // pred_region
          %s357 = ssub.s32 16, 16
          %358 = vsyncadd [#allocation12], %s357
          %s360 = sshll.u32 [#allocation11], 4
          %s361 = int_to_ptr.vmem [resolvable:$true] %s360
          %363 = dma.hbm_to_vmem [thread:$0]  %s5, 16, %s361, [#allocation12]
        $region32: #{tpu_custom_call.1} parent=11 // pred_fallthru
          _
        // Predicated region
        $region33: #{tpu_custom_call.1} parent=11 // pred_check
          %p364 = pneg %p180
        $region34: #{tpu_custom_call.1} parent=11 // pred_check_branch
          %366 = sbr.rel (%p364) target = $region36
        $region35: #{tpu_custom_call.1} parent=11 // pred_region
          %s368 = ssub.s32 16, 16
          %369 = vsyncadd [#allocation12], %s368
          %s371 = sshll.u32 [#allocation13], 4
          %s372 = int_to_ptr.vmem [resolvable:$true] %s371
          %374 = dma.hbm_to_vmem [thread:$0]  %s6, 16, %s372, [#allocation12]
        $region36: #{tpu_custom_call.1} parent=11 // pred_fallthru
          _
        // Predicated region
        $region37: #{tpu_custom_call.1} parent=11 // pred_check
          %p375 = pneg %p201
        $region38: #{tpu_custom_call.1} parent=11 // pred_check_branch
          %377 = sbr.rel (%p375) target = $region40
        $region39: #{tpu_custom_call.1} parent=11 // pred_region
          %s379 = ssub.s32 256, 256
          %380 = vsyncadd [#allocation15], %s379
          %s381 = sshll.u32 [#allocation14], 4
          %s382 = int_to_ptr.vmem [resolvable:$true] %s381
          %387 = dma.hbm_to_vmem [thread:$0]  %s7, 256, %s382, [#allocation15], 64, 64, 4
        $region40: #{tpu_custom_call.1} parent=11 // pred_fallthru
          _
        // Predicated region
        $region41: #{tpu_custom_call.1} parent=11 // pred_check
          %p388 = pneg %p222
        $region42: #{tpu_custom_call.1} parent=11 // pred_check_branch
          %390 = sbr.rel (%p388) target = $region44
        $region43: #{tpu_custom_call.1} parent=11 // pred_region
          %s392 = ssub.s32 16, 16
          %393 = vsyncadd [#allocation15], %s392
          %s395 = sshll.u32 [#allocation16], 4
          %s396 = int_to_ptr.vmem [resolvable:$true] %s395
          %398 = dma.hbm_to_vmem [thread:$0]  %s8, 16, %s396, [#allocation15]
        $region44: #{tpu_custom_call.1} parent=11 // pred_fallthru
          _
        // Predicated region
        $region45: #{tpu_custom_call.1} parent=11 // pred_check
          %p399 = pneg %p243
        $region46: #{tpu_custom_call.1} parent=11 // pred_check_branch
          %401 = sbr.rel (%p399) target = $region48
        $region47: #{tpu_custom_call.1} parent=11 // pred_region
          %s403 = ssub.s32 1024, 1024
          %404 = vsyncadd [#allocation18], %s403
          %s405 = sshll.u32 [#allocation17], 4
          %s406 = int_to_ptr.vmem [resolvable:$true] %s405
          %411 = dma.hbm_to_vmem [thread:$0]  %s9, 1024, %s406, [#allocation18], 64, 64, 4
        $region48: #{tpu_custom_call.1} parent=11 // pred_fallthru
          _
        // Predicated region
        $region49: #{tpu_custom_call.1} parent=11 // pred_check
          %p412 = pneg %p264
        $region50: #{tpu_custom_call.1} parent=11 // pred_check_branch
          %414 = sbr.rel (%p412) target = $region52
        $region51: #{tpu_custom_call.1} parent=11 // pred_region
          %s416 = ssub.s32 16, 16
          %417 = vsyncadd [#allocation18], %s416
          %s419 = sshll.u32 [#allocation19], 4
          %s420 = int_to_ptr.vmem [resolvable:$true] %s419
          %422 = dma.hbm_to_vmem [thread:$0]  %s10, 16, %s420, [#allocation18]
        $region52: #{tpu_custom_call.1} parent=11 // pred_fallthru
          _
      $region12: #{tpu_custom_call.1} parent=5 // pred_fallthru
        _
      %p423 = scmp.lt.s32.totalorder %s28, 2
      // Predicated region
      $region53: #{tpu_custom_call.1} parent=5 // pred_check
        %p424 = pneg %p423
      $region54: #{tpu_custom_call.1} parent=5 // pred_check_branch
        %426 = sbr.rel (%p424) target = $region56
      $region55: #{tpu_custom_call.1} parent=5 // pred_region
        // Predicated region
        $region57: #{tpu_custom_call.1} parent=55 // pred_check
          %p427 = pneg %p48
        $region58: #{tpu_custom_call.1} parent=55 // pred_check_branch
          %429 = sbr.rel (%p427) target = $region60
        $region59: #{tpu_custom_call.1} parent=55 // pred_region
          %s430 = sand.u32 %s38, 1
          %s431 = scalar_lea.sflag [#allocation3], %s430
          %s432 = sand.u32 %s38, 1
          %s433 = smul.addr %s432, 8
          %s434 = scalar_lea.vmem [#allocation2], %s433
          %s436 = ssub.s32 128, 128
          %437 = vsyncadd %s431, %s436
          %s438 = smul.addr %s28, 128
          %s439 = scalar_lea.hbm %s0, %s438
          %s441 = sshll.u32 %s434, 4
          %s442 = int_to_ptr.vmem [resolvable:$true] %s441
          %444 = dma.hbm_to_vmem [thread:$0]  %s439, 128, %s442, %s431
        $region60: #{tpu_custom_call.1} parent=55 // pred_fallthru
          _
      $region56: #{tpu_custom_call.1} parent=5 // pred_fallthru
        _
      %p445 = scmp.le.s32.totalorder 1, %s28
      %p446 = scmp.lt.s32.totalorder %s28, 3
      %p447 = pnand %p445, %p446
      %p448 = pneg %p447
      // Predicated region
      $region61: #{tpu_custom_call.1} parent=5 // pred_check
        _
      $region62: #{tpu_custom_call.1} parent=5 // pred_check_branch
        %450 = sbr.rel (%p447) target = $region64
      $region63: #{tpu_custom_call.1} parent=5 // pred_region
        %s451 = ssub.s32 %s28, 1
        %s452 = sand.u32 %s41, 1
        %s453 = scalar_lea.sflag [#allocation3], %s452
        %s454 = sand.u32 %s41, 1
        %s455 = smul.addr %s454, 8
        %s456 = scalar_lea.vmem [#allocation2], %s455
        // Predicated region
        $region65: #{tpu_custom_call.1} parent=63 // pred_check
          %p457 = pneg %p54
        $region66: #{tpu_custom_call.1} parent=63 // pred_check_branch
          %459 = sbr.rel (%p457) target = $region68
        $region67: #{tpu_custom_call.1} parent=63 // pred_region
          %460 = dma.done %s453, 128
        $region68: #{tpu_custom_call.1} parent=63 // pred_fallthru
          _
        // Predicated region
        $region69: #{tpu_custom_call.1} parent=63 // pred_check
          %p461 = pneg %p75
        $region70: #{tpu_custom_call.1} parent=63 // pred_check_branch
          %463 = sbr.rel (%p461) target = $region72
        $region71: #{tpu_custom_call.1} parent=63 // pred_region
          %464 = dma.done [#allocation6], 16
        $region72: #{tpu_custom_call.1} parent=63 // pred_fallthru
          _
        // Predicated region
        $region73: #{tpu_custom_call.1} parent=63 // pred_check
          %p465 = pneg %p96
        $region74: #{tpu_custom_call.1} parent=63 // pred_check_branch
          %467 = sbr.rel (%p465) target = $region76
        $region75: #{tpu_custom_call.1} parent=63 // pred_region
          %468 = dma.done [#allocation6], 16
        $region76: #{tpu_custom_call.1} parent=63 // pred_fallthru
          _
        // Predicated region
        $region77: #{tpu_custom_call.1} parent=63 // pred_check
          %p469 = pneg %p117
        $region78: #{tpu_custom_call.1} parent=63 // pred_check_branch
          %471 = sbr.rel (%p469) target = $region80
        $region79: #{tpu_custom_call.1} parent=63 // pred_region
          %472 = dma.done [#allocation9], 256
        $region80: #{tpu_custom_call.1} parent=63 // pred_fallthru
          _
        // Predicated region
        $region81: #{tpu_custom_call.1} parent=63 // pred_check
          %p473 = pneg %p138
        $region82: #{tpu_custom_call.1} parent=63 // pred_check_branch
          %475 = sbr.rel (%p473) target = $region84
        $region83: #{tpu_custom_call.1} parent=63 // pred_region
          %476 = dma.done [#allocation9], 256
        $region84: #{tpu_custom_call.1} parent=63 // pred_fallthru
          _
        // Predicated region
        $region85: #{tpu_custom_call.1} parent=63 // pred_check
          %p477 = pneg %p159
        $region86: #{tpu_custom_call.1} parent=63 // pred_check_branch
          %479 = sbr.rel (%p477) target = $region88
        $region87: #{tpu_custom_call.1} parent=63 // pred_region
          %480 = dma.done [#allocation12], 16
        $region88: #{tpu_custom_call.1} parent=63 // pred_fallthru
          _
        // Predicated region
        $region89: #{tpu_custom_call.1} parent=63 // pred_check
          %p481 = pneg %p180
        $region90: #{tpu_custom_call.1} parent=63 // pred_check_branch
          %483 = sbr.rel (%p481) target = $region92
        $region91: #{tpu_custom_call.1} parent=63 // pred_region
          %484 = dma.done [#allocation12], 16
        $region92: #{tpu_custom_call.1} parent=63 // pred_fallthru
          _
        // Predicated region
        $region93: #{tpu_custom_call.1} parent=63 // pred_check
          %p485 = pneg %p201
        $region94: #{tpu_custom_call.1} parent=63 // pred_check_branch
          %487 = sbr.rel (%p485) target = $region96
        $region95: #{tpu_custom_call.1} parent=63 // pred_region
          %488 = dma.done [#allocation15], 256
        $region96: #{tpu_custom_call.1} parent=63 // pred_fallthru
          _
        // Predicated region
        $region97: #{tpu_custom_call.1} parent=63 // pred_check
          %p489 = pneg %p222
        $region98: #{tpu_custom_call.1} parent=63 // pred_check_branch
          %491 = sbr.rel (%p489) target = $region100
        $region99: #{tpu_custom_call.1} parent=63 // pred_region
          %492 = dma.done [#allocation15], 16
        $region100: #{tpu_custom_call.1} parent=63 // pred_fallthru
          _
        // Predicated region
        $region101: #{tpu_custom_call.1} parent=63 // pred_check
          %p493 = pneg %p243
        $region102: #{tpu_custom_call.1} parent=63 // pred_check_branch
          %495 = sbr.rel (%p493) target = $region104
        $region103: #{tpu_custom_call.1} parent=63 // pred_region
          %496 = dma.done [#allocation18], 1024
        $region104: #{tpu_custom_call.1} parent=63 // pred_fallthru
          _
        // Predicated region
        $region105: #{tpu_custom_call.1} parent=63 // pred_check
          %p497 = pneg %p264
        $region106: #{tpu_custom_call.1} parent=63 // pred_check_branch
          %499 = sbr.rel (%p497) target = $region108
        $region107: #{tpu_custom_call.1} parent=63 // pred_region
          %500 = dma.done [#allocation18], 16
        $region108: #{tpu_custom_call.1} parent=63 // pred_fallthru
          _
        %s501 = sand.u32 %s41, 1
        %s502 = scalar_lea.sflag [#allocation3], %s501
        %s503 = sand.u32 %s41, 1
        %s504 = smul.addr %s503, 8
        %s505 = scalar_lea.vmem [#allocation2], %s504
        %p506 = pneg %p54
        %p507 = pneg %p51
        %p508 = pneg %p75
        %p509 = pneg %p72
        %p510 = pneg %p96
        %p511 = pneg %p93
        %p512 = pneg %p117
        %p513 = pneg %p114
        %p514 = pneg %p138
        %p515 = pneg %p135
        %p516 = pneg %p159
        %p517 = pneg %p156
        %p518 = pneg %p180
        %p519 = pneg %p177
        %p520 = pneg %p201
        %p521 = pneg %p198
        %p522 = pneg %p222
        %p523 = pneg %p219
        %p524 = pneg %p243
        %p525 = pneg %p240
        %p526 = pneg %p264
        %p527 = pneg %p261
        %p528 = pneg %p290
        %p529 = pneg %p287
        %s530 = sand.u32 %s277, 1
        %s531 = scalar_lea.sflag [#allocation4], %s530
        %s532 = sand.u32 %s277, 1
        %s533 = smul.addr %s532, 8
        %s534 = scalar_lea.vmem [#allocation20], %s533
        %v536 = vld [vmem:[%s456] sm:$0xff]
        %v537 = vld [vmem:[#allocation5] sm:$0x1]
        %v538 = vld [vmem:[#allocation7] sm:$0x1]
        %vm539 = vcmask 261120
        %v540 = vsel %vm539, %v536, 0.0
        %541 = vadd.xlane.f32.xlu0 %v540
        %v542 = vpop.xlane.xlu0 %541
        %v543 = vrcp.pop 32.0
        %v544 = vmul.f32 %v542, %v543
        %v545 = vsub.f32 %v536, %v544
        %v546 = vmul.f32 %v545, %v545
        %v547 = vsel %vm539, %v546, 0.0
        %548 = vadd.xlane.f32.xlu0 %v547
        %v549 = vpop.xlane.xlu0 %548
        %v550 = vmul.f32 %v549, %v543
        %v551 = vadd.f32 %v550, 1e-05
        %v552 = vrsqrt.pop %v551
        %v553 = vmul.f32 %v545, %v552
        %v555 = vlaneseq
        %v556 = vshrl.u32 %v555, 7
        %v557 = vsub.s32 0, %v556
        %v558 = vrot.slane %v537, %v557
        %v560 = vmul.f32 %v553, %v558
        %v562 = vlaneseq
        %v563 = vshrl.u32 %v562, 7
        %v564 = vsub.s32 0, %v563
        %v565 = vrot.slane %v538, %v564
        %v567 = vadd.f32 %v560, %v565
        %v568 = vpack.c.bf16 %v567, %v567
        %v569 = vld [vmem:[#allocation8] sm:$0xf]
        %v570 = vld [vmem:[#allocation8 + $0x4] sm:$0xf]
        %v571 = vld [vmem:[#allocation8 + $0x8] sm:$0xf]
        %v572 = vld [vmem:[#allocation8 + $0xc] sm:$0xf]
        %v577 = vunpack.c.l.b16 %v569
        %v578 = vunpack.c.l.b16 %v570
        %v579 = vunpack.c.l.b16 %v571
        %v580 = vunpack.c.l.b16 %v572
        %v581 = vpack.c.b16 %v578, %v577
        %v582 = vpack.c.b16 %v580, %v579
        %v586 = vsel %vm539, %v568, 0
        %588 = vmatprep.subr.bf16.mxu0 0
        %589 = vmatpush1.bf16.msra.mxu0 %v581
        %590 = vmatprep.subr.bf16.mxu0 0
        %591 = vmatpush1.bf16.msra.mxu0 %v582
        %592 = vmatprep.subr.bf16.mxu0 0
        %593 = vmatpush1.bf16.msra.mxu0 0
        %594 = vmatprep.subr.bf16.mxu0 0
        %595 = vmatpush1.bf16.msra.mxu0 0
        %596 = vmatprep.subr.bf16.mxu0 0
        %597 = vmatpush1.bf16.msra.mxu0 0
        %598 = vmatprep.subr.bf16.mxu0 0
        %599 = vmatpush1.bf16.msra.mxu0 0
        %600 = vmatprep.subr.bf16.mxu0 0
        %601 = vmatpush1.bf16.msra.mxu0 0
        %602 = vmatprep.subr.bf16.mxu0 0
        %603 = vmatpush1.bf16.msra.mxu0 0
        %604 = vmatprep.subr.bf16.mxu0 0
        %605 = vmatpush1.bf16.msra.mxu0 0
        %606 = vmatprep.subr.bf16.mxu0 0
        %607 = vmatpush1.bf16.msra.mxu0 0
        %608 = vmatprep.subr.bf16.mxu0 0
        %609 = vmatpush1.bf16.msra.mxu0 0
        %610 = vmatprep.subr.bf16.mxu0 0
        %611 = vmatpush1.bf16.msra.mxu0 0
        %612 = vmatprep.subr.bf16.mxu0 0
        %613 = vmatpush1.bf16.msra.mxu0 0
        %614 = vmatprep.subr.bf16.mxu0 0
        %615 = vmatpush1.bf16.msra.mxu0 0
        %616 = vmatprep.subr.bf16.mxu0 0
        %617 = vmatpush1.bf16.msra.mxu0 0
        %618 = vmatprep.subr.bf16.mxu0 0
        %619 = vmatpush1.bf16.msra.mxu0 0
        %620 = vmatprep.mubr.bf16.mxu0 0
        %621 = vmatmul.mubr.bf16.gmra.mrb[0].mxu0 %v586
        %v622 = vpop.f32.mrb[0].mxu0
        %v623 = vadd.f32 0.0, %v622
        %v624 = vpop.f32.mrb[0].mxu0
        %v625 = vpop.f32.mrb[0].mxu0
        %v626 = vpop.f32.mrb[0].mxu0
        %627 = vdwg.mxu0
        %629 = vrot.lane.b32.xlu0 %v623, 120
        %v630 = vpop.permute.xlu0 %629
        %632 = vrot.lane.b32.xlu0 %v623, 112
        %v633 = vpop.permute.xlu0 %632
        %635 = vrot.lane.b32.xlu0 %v623, 104
        %v636 = vpop.permute.xlu0 %635
        %v638 = vcombine.low %v623, %v633
        %v639 = vcombine.high %v623, %v633
        %v641 = vunpack.c.l.s4 1983009808
        %v642 = vunpack.c.0.s8 %v641
        %v643 = vlaneseq
        %v644 = vshrl.u32 %v643, 7
        %v645 = vsub.s32 %v642, %v644
        %v646 = vrot.slane %v638, %v645
        %v648 = vunpack.c.l.s4 1983009808
        %v649 = vunpack.c.0.s8 %v648
        %v650 = vlaneseq
        %v651 = vshrl.u32 %v650, 7
        %v652 = vsub.s32 %v649, %v651
        %v653 = vrot.slane %v639, %v652
        %v654 = vcombine.low %v630, %v636
        %v655 = vcombine.high %v630, %v636
        %v657 = vunpack.c.l.s4 1983009808
        %v658 = vunpack.c.0.s8 %v657
        %v659 = vlaneseq
        %v660 = vshrl.u32 %v659, 7
        %v661 = vsub.s32 %v658, %v660
        %v662 = vrot.slane %v654, %v661
        %v664 = vunpack.c.l.s4 1983009808
        %v665 = vunpack.c.0.s8 %v664
        %v666 = vlaneseq
        %v667 = vshrl.u32 %v666, 7
        %v668 = vsub.s32 %v665, %v667
        %v669 = vrot.slane %v655, %v668
        %v670 = vcombine.low %v646, %v662
        %v671 = vcombine.high %v646, %v662
        %v673 = vunpack.c.l.s4 1934713408
        %v674 = vunpack.c.0.s8 %v673
        %v675 = vlaneseq
        %v676 = vshrl.u32 %v675, 7
        %v677 = vsub.s32 %v674, %v676
        %v678 = vrot.slane %v670, %v677
        %v680 = vunpack.c.l.s4 1934713408
        %v681 = vunpack.c.0.s8 %v680
        %v682 = vlaneseq
        %v683 = vshrl.u32 %v682, 7
        %v684 = vsub.s32 %v681, %v683
        %v685 = vrot.slane %v671, %v684
        %v686 = vcombine.low %v653, %v669
        %v687 = vcombine.high %v653, %v669
        %v689 = vunpack.c.l.s4 1934713408
        %v690 = vunpack.c.0.s8 %v689
        %v691 = vlaneseq
        %v692 = vshrl.u32 %v691, 7
        %v693 = vsub.s32 %v690, %v692
        %v694 = vrot.slane %v686, %v693
        %v696 = vunpack.c.l.s4 1934713408
        %v697 = vunpack.c.0.s8 %v696
        %v698 = vlaneseq
        %v699 = vshrl.u32 %v698, 7
        %v700 = vsub.s32 %v697, %v699
        %v701 = vrot.slane %v687, %v700
        %v702 = vcombine.high %v678, 0.0
        %v703 = vcombine.high %v685, 0.0
        %v704 = vcombine.high %v694, 0.0
        %v705 = vcombine.high %v701, 0.0
        %v706 = vcombine.low %v678, %v685
        %v708 = vunpack.c.l.s4 1983009808
        %v709 = vunpack.c.0.s8 %v708
        %v710 = vlaneseq
        %v711 = vshrl.u32 %v710, 7
        %v712 = vsub.s32 %v709, %v711
        %v713 = vrot.slane %v706, %v712
        %v714 = vcombine.low %v702, %v703
        %v716 = vunpack.c.l.s4 1983009808
        %v717 = vunpack.c.0.s8 %v716
        %v718 = vlaneseq
        %v719 = vshrl.u32 %v718, 7
        %v720 = vsub.s32 %v717, %v719
        %v721 = vrot.slane %v714, %v720
        %v722 = vcombine.low %v694, %v701
        %v724 = vunpack.c.l.s4 1983009808
        %v725 = vunpack.c.0.s8 %v724
        %v726 = vlaneseq
        %v727 = vshrl.u32 %v726, 7
        %v728 = vsub.s32 %v725, %v727
        %v729 = vrot.slane %v722, %v728
        %v730 = vcombine.low %v704, %v705
        %v732 = vunpack.c.l.s4 1983009808
        %v733 = vunpack.c.0.s8 %v732
        %v734 = vlaneseq
        %v735 = vshrl.u32 %v734, 7
        %v736 = vsub.s32 %v733, %v735
        %v737 = vrot.slane %v730, %v736
        %v738 = vcombine.low %v713, %v721
        %v739 = vcombine.high %v713, %v721
        %v741 = vunpack.c.l.s4 1934713408
        %v742 = vunpack.c.0.s8 %v741
        %v743 = vlaneseq
        %v744 = vshrl.u32 %v743, 7
        %v745 = vsub.s32 %v742, %v744
        %v746 = vrot.slane %v738, %v745
        %v748 = vunpack.c.l.s4 1934713408
        %v749 = vunpack.c.0.s8 %v748
        %v750 = vlaneseq
        %v751 = vshrl.u32 %v750, 7
        %v752 = vsub.s32 %v749, %v751
        %v753 = vrot.slane %v739, %v752
        %v754 = vcombine.low %v729, %v737
        %v755 = vcombine.high %v729, %v737
        %v757 = vunpack.c.l.s4 1934713408
        %v758 = vunpack.c.0.s8 %v757
        %v759 = vlaneseq
        %v760 = vshrl.u32 %v759, 7
        %v761 = vsub.s32 %v758, %v760
        %v762 = vrot.slane %v754, %v761
        %v764 = vunpack.c.l.s4 1934713408
        %v765 = vunpack.c.0.s8 %v764
        %v766 = vlaneseq
        %v767 = vshrl.u32 %v766, 7
        %v768 = vsub.s32 %v765, %v767
        %v769 = vrot.slane %v755, %v768
        %v770 = vcombine.low %v746, %v762
        %v771 = vcombine.high %v746, %v762
        %v772 = vcombine.low %v753, %v769
        %v773 = vcombine.high %v753, %v769
        %v774 = vpack.c.bf16 %v770, %v770
        %v775 = vpack.c.bf16 %v771, %v771
        %v776 = vpack.c.bf16 %v772, %v772
        %v777 = vpack.c.bf16 %v773, %v773
        %778 = vrot.lane.b32.xlu0 %v623, 96
        %v779 = vpop.permute.xlu0 %778
        %780 = vrot.lane.b32.xlu0 %v630, 96
        %v781 = vpop.permute.xlu0 %780
        %782 = vrot.lane.b32.xlu0 %v633, 96
        %v783 = vpop.permute.xlu0 %782
        %784 = vrot.lane.b32.xlu0 %v636, 96
        %v785 = vpop.permute.xlu0 %784
        %v790 = vcombine.low %v779, %v783
        %v791 = vcombine.high %v779, %v783
        %v793 = vunpack.c.l.s4 1983009808
        %v794 = vunpack.c.0.s8 %v793
        %v795 = vlaneseq
        %v796 = vshrl.u32 %v795, 7
        %v797 = vsub.s32 %v794, %v796
        %v798 = vrot.slane %v790, %v797
        %v800 = vunpack.c.l.s4 1983009808
        %v801 = vunpack.c.0.s8 %v800
        %v802 = vlaneseq
        %v803 = vshrl.u32 %v802, 7
        %v804 = vsub.s32 %v801, %v803
        %v805 = vrot.slane %v791, %v804
        %v806 = vcombine.low %v781, %v785
        %v807 = vcombine.high %v781, %v785
        %v809 = vunpack.c.l.s4 1983009808
        %v810 = vunpack.c.0.s8 %v809
        %v811 = vlaneseq
        %v812 = vshrl.u32 %v811, 7
        %v813 = vsub.s32 %v810, %v812
        %v814 = vrot.slane %v806, %v813
        %v816 = vunpack.c.l.s4 1983009808
        %v817 = vunpack.c.0.s8 %v816
        %v818 = vlaneseq
        %v819 = vshrl.u32 %v818, 7
        %v820 = vsub.s32 %v817, %v819
        %v821 = vrot.slane %v807, %v820
        %v822 = vcombine.low %v798, %v814
        %v823 = vcombine.high %v798, %v814
        %v825 = vunpack.c.l.s4 1934713408
        %v826 = vunpack.c.0.s8 %v825
        %v827 = vlaneseq
        %v828 = vshrl.u32 %v827, 7
        %v829 = vsub.s32 %v826, %v828
        %v830 = vrot.slane %v822, %v829
        %v832 = vunpack.c.l.s4 1934713408
        %v833 = vunpack.c.0.s8 %v832
        %v834 = vlaneseq
        %v835 = vshrl.u32 %v834, 7
        %v836 = vsub.s32 %v833, %v835
        %v837 = vrot.slane %v823, %v836
        %v838 = vcombine.low %v805, %v821
        %v839 = vcombine.high %v805, %v821
        %v841 = vunpack.c.l.s4 1934713408
        %v842 = vunpack.c.0.s8 %v841
        %v843 = vlaneseq
        %v844 = vshrl.u32 %v843, 7
        %v845 = vsub.s32 %v842, %v844
        %v846 = vrot.slane %v838, %v845
        %v848 = vunpack.c.l.s4 1934713408
        %v849 = vunpack.c.0.s8 %v848
        %v850 = vlaneseq
        %v851 = vshrl.u32 %v850, 7
        %v852 = vsub.s32 %v849, %v851
        %v853 = vrot.slane %v839, %v852
        %v854 = vcombine.high %v830, 0.0
        %v855 = vcombine.high %v837, 0.0
        %v856 = vcombine.high %v846, 0.0
        %v857 = vcombine.high %v853, 0.0
        %v858 = vcombine.low %v830, %v837
        %v860 = vunpack.c.l.s4 1983009808
        %v861 = vunpack.c.0.s8 %v860
        %v862 = vlaneseq
        %v863 = vshrl.u32 %v862, 7
        %v864 = vsub.s32 %v861, %v863
        %v865 = vrot.slane %v858, %v864
        %v866 = vcombine.low %v854, %v855
        %v868 = vunpack.c.l.s4 1983009808
        %v869 = vunpack.c.0.s8 %v868
        %v870 = vlaneseq
        %v871 = vshrl.u32 %v870, 7
        %v872 = vsub.s32 %v869, %v871
        %v873 = vrot.slane %v866, %v872
        %v874 = vcombine.low %v846, %v853
        %v876 = vunpack.c.l.s4 1983009808
        %v877 = vunpack.c.0.s8 %v876
        %v878 = vlaneseq
        %v879 = vshrl.u32 %v878, 7
        %v880 = vsub.s32 %v877, %v879
        %v881 = vrot.slane %v874, %v880
        %v882 = vcombine.low %v856, %v857
        %v884 = vunpack.c.l.s4 1983009808
        %v885 = vunpack.c.0.s8 %v884
        %v886 = vlaneseq
        %v887 = vshrl.u32 %v886, 7
        %v888 = vsub.s32 %v885, %v887
        %v889 = vrot.slane %v882, %v888
        %v890 = vcombine.low %v865, %v873
        %v891 = vcombine.high %v865, %v873
        %v893 = vunpack.c.l.s4 1934713408
        %v894 = vunpack.c.0.s8 %v893
        %v895 = vlaneseq
        %v896 = vshrl.u32 %v895, 7
        %v897 = vsub.s32 %v894, %v896
        %v898 = vrot.slane %v890, %v897
        %v900 = vunpack.c.l.s4 1934713408
        %v901 = vunpack.c.0.s8 %v900
        %v902 = vlaneseq
        %v903 = vshrl.u32 %v902, 7
        %v904 = vsub.s32 %v901, %v903
        %v905 = vrot.slane %v891, %v904
        %v906 = vcombine.low %v881, %v889
        %v907 = vcombine.high %v881, %v889
        %v909 = vunpack.c.l.s4 1934713408
        %v910 = vunpack.c.0.s8 %v909
        %v911 = vlaneseq
        %v912 = vshrl.u32 %v911, 7
        %v913 = vsub.s32 %v910, %v912
        %v914 = vrot.slane %v906, %v913
        %v916 = vunpack.c.l.s4 1934713408
        %v917 = vunpack.c.0.s8 %v916
        %v918 = vlaneseq
        %v919 = vshrl.u32 %v918, 7
        %v920 = vsub.s32 %v917, %v919
        %v921 = vrot.slane %v907, %v920
        %v922 = vcombine.low %v898, %v914
        %v923 = vcombine.high %v898, %v914
        %v924 = vcombine.low %v905, %v921
        %v925 = vcombine.high %v905, %v921
        %v926 = vpack.c.bf16 %v922, %v922
        %v927 = vpack.c.bf16 %v923, %v923
        %v928 = vpack.c.bf16 %v924, %v924
        %v929 = vpack.c.bf16 %v925, %v925
        %930 = vrot.lane.b32.xlu0 %v623, 64
        %v931 = vpop.permute.xlu0 %930
        %932 = vrot.lane.b32.xlu0 %v630, 64
        %v933 = vpop.permute.xlu0 %932
        %934 = vrot.lane.b32.xlu0 %v633, 64
        %v935 = vpop.permute.xlu0 %934
        %936 = vrot.lane.b32.xlu0 %v636, 64
        %v937 = vpop.permute.xlu0 %936
        %v942 = vcombine.low %v931, %v935
        %v943 = vcombine.high %v931, %v935
        %v945 = vunpack.c.l.s4 1983009808
        %v946 = vunpack.c.0.s8 %v945
        %v947 = vlaneseq
        %v948 = vshrl.u32 %v947, 7
        %v949 = vsub.s32 %v946, %v948
        %v950 = vrot.slane %v942, %v949
        %v952 = vunpack.c.l.s4 1983009808
        %v953 = vunpack.c.0.s8 %v952
        %v954 = vlaneseq
        %v955 = vshrl.u32 %v954, 7
        %v956 = vsub.s32 %v953, %v955
        %v957 = vrot.slane %v943, %v956
        %v958 = vcombine.low %v933, %v937
        %v959 = vcombine.high %v933, %v937
        %v961 = vunpack.c.l.s4 1983009808
        %v962 = vunpack.c.0.s8 %v961
        %v963 = vlaneseq
        %v964 = vshrl.u32 %v963, 7
        %v965 = vsub.s32 %v962, %v964
        %v966 = vrot.slane %v958, %v965
        %v968 = vunpack.c.l.s4 1983009808
        %v969 = vunpack.c.0.s8 %v968
        %v970 = vlaneseq
        %v971 = vshrl.u32 %v970, 7
        %v972 = vsub.s32 %v969, %v971
        %v973 = vrot.slane %v959, %v972
        %v974 = vcombine.low %v950, %v966
        %v975 = vcombine.high %v950, %v966
        %v977 = vunpack.c.l.s4 1934713408
        %v978 = vunpack.c.0.s8 %v977
        %v979 = vlaneseq
        %v980 = vshrl.u32 %v979, 7
        %v981 = vsub.s32 %v978, %v980
        %v982 = vrot.slane %v974, %v981
        %v984 = vunpack.c.l.s4 1934713408
        %v985 = vunpack.c.0.s8 %v984
        %v986 = vlaneseq
        %v987 = vshrl.u32 %v986, 7
        %v988 = vsub.s32 %v985, %v987
        %v989 = vrot.slane %v975, %v988
        %v990 = vcombine.low %v957, %v973
        %v991 = vcombine.high %v957, %v973
        %v993 = vunpack.c.l.s4 1934713408
        %v994 = vunpack.c.0.s8 %v993
        %v995 = vlaneseq
        %v996 = vshrl.u32 %v995, 7
        %v997 = vsub.s32 %v994, %v996
        %v998 = vrot.slane %v990, %v997
        %v1000 = vunpack.c.l.s4 1934713408
        %v1001 = vunpack.c.0.s8 %v1000
        %v1002 = vlaneseq
        %v1003 = vshrl.u32 %v1002, 7
        %v1004 = vsub.s32 %v1001, %v1003
        %v1005 = vrot.slane %v991, %v1004
        %v1006 = vcombine.high %v982, 0.0
        %v1007 = vcombine.high %v989, 0.0
        %v1008 = vcombine.high %v998, 0.0
        %v1009 = vcombine.high %v1005, 0.0
        %v1010 = vcombine.low %v982, %v989
        %v1012 = vunpack.c.l.s4 1983009808
        %v1013 = vunpack.c.0.s8 %v1012
        %v1014 = vlaneseq
        %v1015 = vshrl.u32 %v1014, 7
        %v1016 = vsub.s32 %v1013, %v1015
        %v1017 = vrot.slane %v1010, %v1016
        %v1018 = vcombine.low %v1006, %v1007
        %v1020 = vunpack.c.l.s4 1983009808
        %v1021 = vunpack.c.0.s8 %v1020
        %v1022 = vlaneseq
        %v1023 = vshrl.u32 %v1022, 7
        %v1024 = vsub.s32 %v1021, %v1023
        %v1025 = vrot.slane %v1018, %v1024
        %v1026 = vcombine.low %v998, %v1005
        %v1028 = vunpack.c.l.s4 1983009808
        %v1029 = vunpack.c.0.s8 %v1028
        %v1030 = vlaneseq
        %v1031 = vshrl.u32 %v1030, 7
        %v1032 = vsub.s32 %v1029, %v1031
        %v1033 = vrot.slane %v1026, %v1032
        %v1034 = vcombine.low %v1008, %v1009
        %v1036 = vunpack.c.l.s4 1983009808
        %v1037 = vunpack.c.0.s8 %v1036
        %v1038 = vlaneseq
        %v1039 = vshrl.u32 %v1038, 7
        %v1040 = vsub.s32 %v1037, %v1039
        %v1041 = vrot.slane %v1034, %v1040
        %v1042 = vcombine.low %v1017, %v1025
        %v1043 = vcombine.high %v1017, %v1025
        %v1045 = vunpack.c.l.s4 1934713408
        %v1046 = vunpack.c.0.s8 %v1045
        %v1047 = vlaneseq
        %v1048 = vshrl.u32 %v1047, 7
        %v1049 = vsub.s32 %v1046, %v1048
        %v1050 = vrot.slane %v1042, %v1049
        %v1052 = vunpack.c.l.s4 1934713408
        %v1053 = vunpack.c.0.s8 %v1052
        %v1054 = vlaneseq
        %v1055 = vshrl.u32 %v1054, 7
        %v1056 = vsub.s32 %v1053, %v1055
        %v1057 = vrot.slane %v1043, %v1056
        %v1058 = vcombine.low %v1033, %v1041
        %v1059 = vcombine.high %v1033, %v1041
        %v1061 = vunpack.c.l.s4 1934713408
        %v1062 = vunpack.c.0.s8 %v1061
        %v1063 = vlaneseq
        %v1064 = vshrl.u32 %v1063, 7
        %v1065 = vsub.s32 %v1062, %v1064
        %v1066 = vrot.slane %v1058, %v1065
        %v1068 = vunpack.c.l.s4 1934713408
        %v1069 = vunpack.c.0.s8 %v1068
        %v1070 = vlaneseq
        %v1071 = vshrl.u32 %v1070, 7
        %v1072 = vsub.s32 %v1069, %v1071
        %v1073 = vrot.slane %v1059, %v1072
        %v1074 = vcombine.low %v1050, %v1066
        %v1075 = vcombine.high %v1050, %v1066
        %v1076 = vcombine.low %v1057, %v1073
        %v1077 = vcombine.high %v1057, %v1073
        %v1078 = vpack.c.bf16 %v1074, %v1074
        %v1079 = vpack.c.bf16 %v1075, %v1075
        %v1080 = vpack.c.bf16 %v1076, %v1076
        %v1081 = vpack.c.bf16 %v1077, %v1077
        %v1082 = vlaneseq
        %v1083 = vshrl.u32 %v1082, 7
        %v1084 = vlaneseq
        %v1085 = vand.u32 %v1084, 127
        %vm1086 = vcmp.le.s32.totalorder %v1085, %v1083
        %v1087 = vsel %vm1086, 0.0, -1e+30
        %vm1088 = vcmask 64512
        %v1090 = vsel %vm1088, %v774, 0
        %v1093 = vsel %vm1088, %v926, 0
        %1095 = vmatprep.subr.bf16.mxu0 0
        %1096 = vmatpush1.bf16.xpose.msra.mxu0 %v1093
        %1097 = vmatprep.subr.bf16.mxu0 0
        %1098 = vmatpush1.bf16.xpose.msra.mxu0 0
        %1099 = vmatprep.subr.bf16.mxu0 0
        %1100 = vmatpush1.bf16.xpose.msra.mxu0 0
        %1101 = vmatprep.subr.bf16.mxu0 0
        %1102 = vmatpush1.bf16.xpose.msra.mxu0 0
        %1103 = vmatprep.subr.bf16.mxu0 0
        %1104 = vmatpush1.bf16.xpose.msra.mxu0 0
        %1105 = vmatprep.subr.bf16.mxu0 0
        %1106 = vmatpush1.bf16.xpose.msra.mxu0 0
        %1107 = vmatprep.subr.bf16.mxu0 0
        %1108 = vmatpush1.bf16.xpose.msra.mxu0 0
        %1109 = vmatprep.subr.bf16.mxu0 0
        %1110 = vmatpush1.bf16.xpose.msra.mxu0 0
        %1111 = vmatprep.subr.bf16.mxu0 0
        %1112 = vmatpush1.bf16.xpose.msra.mxu0 0
        %1113 = vmatprep.subr.bf16.mxu0 0
        %1114 = vmatpush1.bf16.xpose.msra.mxu0 0
        %1115 = vmatprep.subr.bf16.mxu0 0
        %1116 = vmatpush1.bf16.xpose.msra.mxu0 0
        %1117 = vmatprep.subr.bf16.mxu0 0
        %1118 = vmatpush1.bf16.xpose.msra.mxu0 0
        %1119 = vmatprep.subr.bf16.mxu0 0
        %1120 = vmatpush1.bf16.xpose.msra.mxu0 0
        %1121 = vmatprep.subr.bf16.mxu0 0
        %1122 = vmatpush1.bf16.xpose.msra.mxu0 0
        %1123 = vmatprep.subr.bf16.mxu0 0
        %1124 = vmatpush1.bf16.xpose.msra.mxu0 0
        %1125 = vmatprep.subr.bf16.mxu0 0
        %1126 = vmatpush1.bf16.xpose.msra.mxu0 0
        %1127 = vmatprep.mubr.bf16.mxu0 0
        %1128 = vmatmul.mubr.bf16.gmra.mrb[0].mxu0 %v1090
        %v1129 = vpop.f32.mrb[0].mxu0
        %v1130 = vadd.f32 %v1087, %v1129
        %v1131 = vpop.f32.mrb[0].mxu0
        %v1132 = vpop.f32.mrb[0].mxu0
        %v1133 = vpop.f32.mrb[0].mxu0
        %1134 = vdwg.mxu0
        %v1136 = vsel %vm1088, %v775, 0
        %v1139 = vsel %vm1088, %v927, 0
        %1141 = vmatprep.subr.bf16.mxu0 0
        %1142 = vmatpush1.bf16.xpose.msra.mxu0 %v1139
        %1143 = vmatprep.subr.bf16.mxu0 0
        %1144 = vmatpush1.bf16.xpose.msra.mxu0 0
        %1145 = vmatprep.subr.bf16.mxu0 0
        %1146 = vmatpush1.bf16.xpose.msra.mxu0 0
        %1147 = vmatprep.subr.bf16.mxu0 0
        %1148 = vmatpush1.bf16.xpose.msra.mxu0 0
        %1149 = vmatprep.subr.bf16.mxu0 0
        %1150 = vmatpush1.bf16.xpose.msra.mxu0 0
        %1151 = vmatprep.subr.bf16.mxu0 0
        %1152 = vmatpush1.bf16.xpose.msra.mxu0 0
        %1153 = vmatprep.subr.bf16.mxu0 0
        %1154 = vmatpush1.bf16.xpose.msra.mxu0 0
        %1155 = vmatprep.subr.bf16.mxu0 0
        %1156 = vmatpush1.bf16.xpose.msra.mxu0 0
        %1157 = vmatprep.subr.bf16.mxu0 0
        %1158 = vmatpush1.bf16.xpose.msra.mxu0 0
        %1159 = vmatprep.subr.bf16.mxu0 0
        %1160 = vmatpush1.bf16.xpose.msra.mxu0 0
        %1161 = vmatprep.subr.bf16.mxu0 0
        %1162 = vmatpush1.bf16.xpose.msra.mxu0 0
        %1163 = vmatprep.subr.bf16.mxu0 0
        %1164 = vmatpush1.bf16.xpose.msra.mxu0 0
        %1165 = vmatprep.subr.bf16.mxu0 0
        %1166 = vmatpush1.bf16.xpose.msra.mxu0 0
        %1167 = vmatprep.subr.bf16.mxu0 0
        %1168 = vmatpush1.bf16.xpose.msra.mxu0 0
        %1169 = vmatprep.subr.bf16.mxu0 0
        %1170 = vmatpush1.bf16.xpose.msra.mxu0 0
        %1171 = vmatprep.subr.bf16.mxu0 0
        %1172 = vmatpush1.bf16.xpose.msra.mxu0 0
        %1173 = vmatprep.mubr.bf16.mxu0 0
        %1174 = vmatmul.mubr.bf16.gmra.mrb[0].mxu0 %v1136
        %v1175 = vpop.f32.mrb[0].mxu0
        %v1176 = vadd.f32 %v1087, %v1175
        %v1177 = vpop.f32.mrb[0].mxu0
        %v1178 = vpop.f32.mrb[0].mxu0
        %v1179 = vpop.f32.mrb[0].mxu0
        %1180 = vdwg.mxu0
        %v1182 = vsel %vm1088, %v776, 0
        %v1185 = vsel %vm1088, %v928, 0
        %1187 = vmatprep.subr.bf16.mxu0 0
        %1188 = vmatpush1.bf16.xpose.msra.mxu0 %v1185
        %1189 = vmatprep.subr.bf16.mxu0 0
        %1190 = vmatpush1.bf16.xpose.msra.mxu0 0
        %1191 = vmatprep.subr.bf16.mxu0 0
        %1192 = vmatpush1.bf16.xpose.msra.mxu0 0
        %1193 = vmatprep.subr.bf16.mxu0 0
        %1194 = vmatpush1.bf16.xpose.msra.mxu0 0
        %1195 = vmatprep.subr.bf16.mxu0 0
        %1196 = vmatpush1.bf16.xpose.msra.mxu0 0
        %1197 = vmatprep.subr.bf16.mxu0 0
        %1198 = vmatpush1.bf16.xpose.msra.mxu0 0
        %1199 = vmatprep.subr.bf16.mxu0 0
        %1200 = vmatpush1.bf16.xpose.msra.mxu0 0
        %1201 = vmatprep.subr.bf16.mxu0 0
        %1202 = vmatpush1.bf16.xpose.msra.mxu0 0
        %1203 = vmatprep.subr.bf16.mxu0 0
        %1204 = vmatpush1.bf16.xpose.msra.mxu0 0
        %1205 = vmatprep.subr.bf16.mxu0 0
        %1206 = vmatpush1.bf16.xpose.msra.mxu0 0
        %1207 = vmatprep.subr.bf16.mxu0 0
        %1208 = vmatpush1.bf16.xpose.msra.mxu0 0
        %1209 = vmatprep.subr.bf16.mxu0 0
        %1210 = vmatpush1.bf16.xpose.msra.mxu0 0
        %1211 = vmatprep.subr.bf16.mxu0 0
        %1212 = vmatpush1.bf16.xpose.msra.mxu0 0
        %1213 = vmatprep.subr.bf16.mxu0 0
        %1214 = vmatpush1.bf16.xpose.msra.mxu0 0
        %1215 = vmatprep.subr.bf16.mxu0 0
        %1216 = vmatpush1.bf16.xpose.msra.mxu0 0
        %1217 = vmatprep.subr.bf16.mxu0 0
        %1218 = vmatpush1.bf16.xpose.msra.mxu0 0
        %1219 = vmatprep.mubr.bf16.mxu0 0
        %1220 = vmatmul.mubr.bf16.gmra.mrb[0].mxu0 %v1182
        %v1221 = vpop.f32.mrb[0].mxu0
        %v1222 = vadd.f32 %v1087, %v1221
        %v1223 = vpop.f32.mrb[0].mxu0
        %v1224 = vpop.f32.mrb[0].mxu0
        %v1225 = vpop.f32.mrb[0].mxu0
        %1226 = vdwg.mxu0
        %v1228 = vsel %vm1088, %v777, 0
        %v1231 = vsel %vm1088, %v929, 0
        %1233 = vmatprep.subr.bf16.mxu0 0
        %1234 = vmatpush1.bf16.xpose.msra.mxu0 %v1231
        %1235 = vmatprep.subr.bf16.mxu0 0
        %1236 = vmatpush1.bf16.xpose.msra.mxu0 0
        %1237 = vmatprep.subr.bf16.mxu0 0
        %1238 = vmatpush1.bf16.xpose.msra.mxu0 0
        %1239 = vmatprep.subr.bf16.mxu0 0
        %1240 = vmatpush1.bf16.xpose.msra.mxu0 0
        %1241 = vmatprep.subr.bf16.mxu0 0
        %1242 = vmatpush1.bf16.xpose.msra.mxu0 0
        %1243 = vmatprep.subr.bf16.mxu0 0
        %1244 = vmatpush1.bf16.xpose.msra.mxu0 0
        %1245 = vmatprep.subr.bf16.mxu0 0
        %1246 = vmatpush1.bf16.xpose.msra.mxu0 0
        %1247 = vmatprep.subr.bf16.mxu0 0
        %1248 = vmatpush1.bf16.xpose.msra.mxu0 0
        %1249 = vmatprep.subr.bf16.mxu0 0
        %1250 = vmatpush1.bf16.xpose.msra.mxu0 0
        %1251 = vmatprep.subr.bf16.mxu0 0
        %1252 = vmatpush1.bf16.xpose.msra.mxu0 0
        %1253 = vmatprep.subr.bf16.mxu0 0
        %1254 = vmatpush1.bf16.xpose.msra.mxu0 0
        %1255 = vmatprep.subr.bf16.mxu0 0
        %1256 = vmatpush1.bf16.xpose.msra.mxu0 0
        %1257 = vmatprep.subr.bf16.mxu0 0
        %1258 = vmatpush1.bf16.xpose.msra.mxu0 0
        %1259 = vmatprep.subr.bf16.mxu0 0
        %1260 = vmatpush1.bf16.xpose.msra.mxu0 0
        %1261 = vmatprep.subr.bf16.mxu0 0
        %1262 = vmatpush1.bf16.xpose.msra.mxu0 0
        %1263 = vmatprep.subr.bf16.mxu0 0
        %1264 = vmatpush1.bf16.xpose.msra.mxu0 0
        %1265 = vmatprep.mubr.bf16.mxu0 0
        %1266 = vmatmul.mubr.bf16.gmra.mrb[0].mxu0 %v1228
        %v1267 = vpop.f32.mrb[0].mxu0
        %v1268 = vadd.f32 %v1087, %v1267
        %v1269 = vpop.f32.mrb[0].mxu0
        %v1270 = vpop.f32.mrb[0].mxu0
        %v1271 = vpop.f32.mrb[0].mxu0
        %1272 = vdwg.mxu0
        %v1273 = vsel %vm1088, %v1130, -inf
        %1274 = vmax.xlane.f32.xlu0 %v1273
        %v1275 = vpop.xlane.xlu0 %1274
        %v1276 = vsel %vm1088, %v1176, -inf
        %1277 = vmax.xlane.f32.xlu0 %v1276
        %v1278 = vpop.xlane.xlu0 %1277
        %v1279 = vsel %vm1088, %v1222, -inf
        %1280 = vmax.xlane.f32.xlu0 %v1279
        %v1281 = vpop.xlane.xlu0 %1280
        %v1282 = vsel %vm1088, %v1268, -inf
        %1283 = vmax.xlane.f32.xlu0 %v1282
        %v1284 = vpop.xlane.xlu0 %1283
        %v1285 = vsub.f32 %v1130, %v1275
        %v1286 = vsub.f32 %v1176, %v1278
        %v1287 = vsub.f32 %v1222, %v1281
        %v1288 = vsub.f32 %v1268, %v1284
        %v1289 = vmul.f32 %v1285, 1.442695
        %v1290 = vpow.pop %v1289
        %v1291 = vmul.f32 %v1286, 1.442695
        %v1292 = vpow.pop %v1291
        %v1293 = vmul.f32 %v1287, 1.442695
        %v1294 = vpow.pop %v1293
        %v1295 = vmul.f32 %v1288, 1.442695
        %v1296 = vpow.pop %v1295
        %v1297 = vsel %vm1088, %v1290, 0.0
        %1298 = vadd.xlane.f32.xlu0 %v1297
        %v1299 = vpop.xlane.xlu0 %1298
        %v1300 = vsel %vm1088, %v1292, 0.0
        %1301 = vadd.xlane.f32.xlu0 %v1300
        %v1302 = vpop.xlane.xlu0 %1301
        %v1303 = vsel %vm1088, %v1294, 0.0
        %1304 = vadd.xlane.f32.xlu0 %v1303
        %v1305 = vpop.xlane.xlu0 %1304
        %v1306 = vsel %vm1088, %v1296, 0.0
        %1307 = vadd.xlane.f32.xlu0 %v1306
        %v1308 = vpop.xlane.xlu0 %1307
        %v1309 = vrcp.pop %v1299
        %v1310 = vrcp.pop %v1302
        %v1311 = vrcp.pop %v1305
        %v1312 = vrcp.pop %v1308
        %v1313 = vmul.f32 %v1290, %v1309
        %v1314 = vmul.f32 %v1292, %v1310
        %v1315 = vmul.f32 %v1294, %v1311
        %v1316 = vmul.f32 %v1296, %v1312
        %v1317 = vpack.c.bf16 %v1313, %v1313
        %v1318 = vpack.c.bf16 %v1314, %v1314
        %v1319 = vpack.c.bf16 %v1315, %v1315
        %v1320 = vpack.c.bf16 %v1316, %v1316
        %v1322 = vsel %vm1088, %v1317, 0
        %vm1324 = vcmask 1043456
        %v1326 = vsel %vm1324, %v1078, 0
        %1328 = vmatprep.subr.bf16.mxu0 0
        %1329 = vmatpush1.bf16.msra.mxu0 %v1326
        %1330 = vmatprep.subr.bf16.mxu0 0
        %1331 = vmatpush1.bf16.msra.mxu0 0
        %1332 = vmatprep.subr.bf16.mxu0 0
        %1333 = vmatpush1.bf16.msra.mxu0 0
        %1334 = vmatprep.subr.bf16.mxu0 0
        %1335 = vmatpush1.bf16.msra.mxu0 0
        %1336 = vmatprep.subr.bf16.mxu0 0
        %1337 = vmatpush1.bf16.msra.mxu0 0
        %1338 = vmatprep.subr.bf16.mxu0 0
        %1339 = vmatpush1.bf16.msra.mxu0 0
        %1340 = vmatprep.subr.bf16.mxu0 0
        %1341 = vmatpush1.bf16.msra.mxu0 0
        %1342 = vmatprep.subr.bf16.mxu0 0
        %1343 = vmatpush1.bf16.msra.mxu0 0
        %1344 = vmatprep.subr.bf16.mxu0 0
        %1345 = vmatpush1.bf16.msra.mxu0 0
        %1346 = vmatprep.subr.bf16.mxu0 0
        %1347 = vmatpush1.bf16.msra.mxu0 0
        %1348 = vmatprep.subr.bf16.mxu0 0
        %1349 = vmatpush1.bf16.msra.mxu0 0
        %1350 = vmatprep.subr.bf16.mxu0 0
        %1351 = vmatpush1.bf16.msra.mxu0 0
        %1352 = vmatprep.subr.bf16.mxu0 0
        %1353 = vmatpush1.bf16.msra.mxu0 0
        %1354 = vmatprep.subr.bf16.mxu0 0
        %1355 = vmatpush1.bf16.msra.mxu0 0
        %1356 = vmatprep.subr.bf16.mxu0 0
        %1357 = vmatpush1.bf16.msra.mxu0 0
        %1358 = vmatprep.subr.bf16.mxu0 0
        %1359 = vmatpush1.bf16.msra.mxu0 0
        %1360 = vmatprep.mubr.bf16.mxu0 0
        %1361 = vmatmul.mubr.bf16.gmra.mrb[0].mxu0 %v1322
        %v1362 = vpop.f32.mrb[0].mxu0
        %v1363 = vadd.f32 0.0, %v1362
        %v1364 = vpop.f32.mrb[0].mxu0
        %v1365 = vpop.f32.mrb[0].mxu0
        %v1366 = vpop.f32.mrb[0].mxu0
        %1367 = vdwg.mxu0
        %v1369 = vsel %vm1088, %v1318, 0
        %v1372 = vsel %vm1324, %v1079, 0
        %1374 = vmatprep.subr.bf16.mxu0 0
        %1375 = vmatpush1.bf16.msra.mxu0 %v1372
        %1376 = vmatprep.subr.bf16.mxu0 0
        %1377 = vmatpush1.bf16.msra.mxu0 0
        %1378 = vmatprep.subr.bf16.mxu0 0
        %1379 = vmatpush1.bf16.msra.mxu0 0
        %1380 = vmatprep.subr.bf16.mxu0 0
        %1381 = vmatpush1.bf16.msra.mxu0 0
        %1382 = vmatprep.subr.bf16.mxu0 0
        %1383 = vmatpush1.bf16.msra.mxu0 0
        %1384 = vmatprep.subr.bf16.mxu0 0
        %1385 = vmatpush1.bf16.msra.mxu0 0
        %1386 = vmatprep.subr.bf16.mxu0 0
        %1387 = vmatpush1.bf16.msra.mxu0 0
        %1388 = vmatprep.subr.bf16.mxu0 0
        %1389 = vmatpush1.bf16.msra.mxu0 0
        %1390 = vmatprep.subr.bf16.mxu0 0
        %1391 = vmatpush1.bf16.msra.mxu0 0
        %1392 = vmatprep.subr.bf16.mxu0 0
        %1393 = vmatpush1.bf16.msra.mxu0 0
        %1394 = vmatprep.subr.bf16.mxu0 0
        %1395 = vmatpush1.bf16.msra.mxu0 0
        %1396 = vmatprep.subr.bf16.mxu0 0
        %1397 = vmatpush1.bf16.msra.mxu0 0
        %1398 = vmatprep.subr.bf16.mxu0 0
        %1399 = vmatpush1.bf16.msra.mxu0 0
        %1400 = vmatprep.subr.bf16.mxu0 0
        %1401 = vmatpush1.bf16.msra.mxu0 0
        %1402 = vmatprep.subr.bf16.mxu0 0
        %1403 = vmatpush1.bf16.msra.mxu0 0
        %1404 = vmatprep.subr.bf16.mxu0 0
        %1405 = vmatpush1.bf16.msra.mxu0 0
        %1406 = vmatprep.mubr.bf16.mxu0 0
        %1407 = vmatmul.mubr.bf16.gmra.mrb[0].mxu0 %v1369
        %v1408 = vpop.f32.mrb[0].mxu0
        %v1409 = vadd.f32 0.0, %v1408
        %v1410 = vpop.f32.mrb[0].mxu0
        %v1411 = vpop.f32.mrb[0].mxu0
        %v1412 = vpop.f32.mrb[0].mxu0
        %1413 = vdwg.mxu0
        %v1415 = vsel %vm1088, %v1319, 0
        %v1418 = vsel %vm1324, %v1080, 0
        %1420 = vmatprep.subr.bf16.mxu0 0
        %1421 = vmatpush1.bf16.msra.mxu0 %v1418
        %1422 = vmatprep.subr.bf16.mxu0 0
        %1423 = vmatpush1.bf16.msra.mxu0 0
        %1424 = vmatprep.subr.bf16.mxu0 0
        %1425 = vmatpush1.bf16.msra.mxu0 0
        %1426 = vmatprep.subr.bf16.mxu0 0
        %1427 = vmatpush1.bf16.msra.mxu0 0
        %1428 = vmatprep.subr.bf16.mxu0 0
        %1429 = vmatpush1.bf16.msra.mxu0 0
        %1430 = vmatprep.subr.bf16.mxu0 0
        %1431 = vmatpush1.bf16.msra.mxu0 0
        %1432 = vmatprep.subr.bf16.mxu0 0
        %1433 = vmatpush1.bf16.msra.mxu0 0
        %1434 = vmatprep.subr.bf16.mxu0 0
        %1435 = vmatpush1.bf16.msra.mxu0 0
        %1436 = vmatprep.subr.bf16.mxu0 0
        %1437 = vmatpush1.bf16.msra.mxu0 0
        %1438 = vmatprep.subr.bf16.mxu0 0
        %1439 = vmatpush1.bf16.msra.mxu0 0
        %1440 = vmatprep.subr.bf16.mxu0 0
        %1441 = vmatpush1.bf16.msra.mxu0 0
        %1442 = vmatprep.subr.bf16.mxu0 0
        %1443 = vmatpush1.bf16.msra.mxu0 0
        %1444 = vmatprep.subr.bf16.mxu0 0
        %1445 = vmatpush1.bf16.msra.mxu0 0
        %1446 = vmatprep.subr.bf16.mxu0 0
        %1447 = vmatpush1.bf16.msra.mxu0 0
        %1448 = vmatprep.subr.bf16.mxu0 0
        %1449 = vmatpush1.bf16.msra.mxu0 0
        %1450 = vmatprep.subr.bf16.mxu0 0
        %1451 = vmatpush1.bf16.msra.mxu0 0
        %1452 = vmatprep.mubr.bf16.mxu0 0
        %1453 = vmatmul.mubr.bf16.gmra.mrb[0].mxu0 %v1415
        %v1454 = vpop.f32.mrb[0].mxu0
        %v1455 = vadd.f32 0.0, %v1454
        %v1456 = vpop.f32.mrb[0].mxu0
        %v1457 = vpop.f32.mrb[0].mxu0
        %v1458 = vpop.f32.mrb[0].mxu0
        %1459 = vdwg.mxu0
        %v1461 = vsel %vm1088, %v1320, 0
        %v1464 = vsel %vm1324, %v1081, 0
        %1466 = vmatprep.subr.bf16.mxu0 0
        %1467 = vmatpush1.bf16.msra.mxu0 %v1464
        %1468 = vmatprep.subr.bf16.mxu0 0
        %1469 = vmatpush1.bf16.msra.mxu0 0
        %1470 = vmatprep.subr.bf16.mxu0 0
        %1471 = vmatpush1.bf16.msra.mxu0 0
        %1472 = vmatprep.subr.bf16.mxu0 0
        %1473 = vmatpush1.bf16.msra.mxu0 0
        %1474 = vmatprep.subr.bf16.mxu0 0
        %1475 = vmatpush1.bf16.msra.mxu0 0
        %1476 = vmatprep.subr.bf16.mxu0 0
        %1477 = vmatpush1.bf16.msra.mxu0 0
        %1478 = vmatprep.subr.bf16.mxu0 0
        %1479 = vmatpush1.bf16.msra.mxu0 0
        %1480 = vmatprep.subr.bf16.mxu0 0
        %1481 = vmatpush1.bf16.msra.mxu0 0
        %1482 = vmatprep.subr.bf16.mxu0 0
        %1483 = vmatpush1.bf16.msra.mxu0 0
        %1484 = vmatprep.subr.bf16.mxu0 0
        %1485 = vmatpush1.bf16.msra.mxu0 0
        %1486 = vmatprep.subr.bf16.mxu0 0
        %1487 = vmatpush1.bf16.msra.mxu0 0
        %1488 = vmatprep.subr.bf16.mxu0 0
        %1489 = vmatpush1.bf16.msra.mxu0 0
        %1490 = vmatprep.subr.bf16.mxu0 0
        %1491 = vmatpush1.bf16.msra.mxu0 0
        %1492 = vmatprep.subr.bf16.mxu0 0
        %1493 = vmatpush1.bf16.msra.mxu0 0
        %1494 = vmatprep.subr.bf16.mxu0 0
        %1495 = vmatpush1.bf16.msra.mxu0 0
        %1496 = vmatprep.subr.bf16.mxu0 0
        %1497 = vmatpush1.bf16.msra.mxu0 0
        %1498 = vmatprep.mubr.bf16.mxu0 0
        %1499 = vmatmul.mubr.bf16.gmra.mrb[0].mxu0 %v1461
        %v1500 = vpop.f32.mrb[0].mxu0
        %v1501 = vadd.f32 0.0, %v1500
        %v1502 = vpop.f32.mrb[0].mxu0
        %v1503 = vpop.f32.mrb[0].mxu0
        %v1504 = vpop.f32.mrb[0].mxu0
        %1505 = vdwg.mxu0
        %v1506 = vcombine.low %v1363, %v1455
        %v1507 = vcombine.high %v1363, %v1455
        %v1509 = vunpack.c.l.s4 1983009808
        %v1510 = vunpack.c.0.s8 %v1509
        %v1511 = vlaneseq
        %v1512 = vshrl.u32 %v1511, 7
        %v1513 = vsub.s32 %v1510, %v1512
        %v1514 = vrot.slane %v1506, %v1513
        %v1516 = vunpack.c.l.s4 1983009808
        %v1517 = vunpack.c.0.s8 %v1516
        %v1518 = vlaneseq
        %v1519 = vshrl.u32 %v1518, 7
        %v1520 = vsub.s32 %v1517, %v1519
        %v1521 = vrot.slane %v1507, %v1520
        %v1522 = vcombine.low %v1409, %v1501
        %v1523 = vcombine.high %v1409, %v1501
        %v1525 = vunpack.c.l.s4 1983009808
        %v1526 = vunpack.c.0.s8 %v1525
        %v1527 = vlaneseq
        %v1528 = vshrl.u32 %v1527, 7
        %v1529 = vsub.s32 %v1526, %v1528
        %v1530 = vrot.slane %v1522, %v1529
        %v1532 = vunpack.c.l.s4 1983009808
        %v1533 = vunpack.c.0.s8 %v1532
        %v1534 = vlaneseq
        %v1535 = vshrl.u32 %v1534, 7
        %v1536 = vsub.s32 %v1533, %v1535
        %v1537 = vrot.slane %v1523, %v1536
        %v1538 = vcombine.low %v1514, %v1530
        %v1539 = vcombine.high %v1514, %v1530
        %v1541 = vunpack.c.l.s4 1934713408
        %v1542 = vunpack.c.0.s8 %v1541
        %v1543 = vlaneseq
        %v1544 = vshrl.u32 %v1543, 7
        %v1545 = vsub.s32 %v1542, %v1544
        %v1546 = vrot.slane %v1538, %v1545
        %v1548 = vunpack.c.l.s4 1934713408
        %v1549 = vunpack.c.0.s8 %v1548
        %v1550 = vlaneseq
        %v1551 = vshrl.u32 %v1550, 7
        %v1552 = vsub.s32 %v1549, %v1551
        %v1553 = vrot.slane %v1539, %v1552
        %v1554 = vcombine.low %v1521, %v1537
        %v1555 = vcombine.high %v1521, %v1537
        %v1557 = vunpack.c.l.s4 1934713408
        %v1558 = vunpack.c.0.s8 %v1557
        %v1559 = vlaneseq
        %v1560 = vshrl.u32 %v1559, 7
        %v1561 = vsub.s32 %v1558, %v1560
        %v1562 = vrot.slane %v1554, %v1561
        %v1564 = vunpack.c.l.s4 1934713408
        %v1565 = vunpack.c.0.s8 %v1564
        %v1566 = vlaneseq
        %v1567 = vshrl.u32 %v1566, 7
        %v1568 = vsub.s32 %v1565, %v1567
        %v1569 = vrot.slane %v1555, %v1568
        %v1570 = vcombine.high %v1546, 0.0
        %v1571 = vcombine.high %v1553, 0.0
        %v1572 = vcombine.high %v1562, 0.0
        %v1573 = vcombine.high %v1569, 0.0
        %v1574 = vcombine.low %v1546, %v1553
        %v1576 = vunpack.c.l.s4 1983009808
        %v1577 = vunpack.c.0.s8 %v1576
        %v1578 = vlaneseq
        %v1579 = vshrl.u32 %v1578, 7
        %v1580 = vsub.s32 %v1577, %v1579
        %v1581 = vrot.slane %v1574, %v1580
        %v1582 = vcombine.low %v1570, %v1571
        %v1584 = vunpack.c.l.s4 1983009808
        %v1585 = vunpack.c.0.s8 %v1584
        %v1586 = vlaneseq
        %v1587 = vshrl.u32 %v1586, 7
        %v1588 = vsub.s32 %v1585, %v1587
        %v1589 = vrot.slane %v1582, %v1588
        %v1590 = vcombine.low %v1562, %v1569
        %v1592 = vunpack.c.l.s4 1983009808
        %v1593 = vunpack.c.0.s8 %v1592
        %v1594 = vlaneseq
        %v1595 = vshrl.u32 %v1594, 7
        %v1596 = vsub.s32 %v1593, %v1595
        %v1597 = vrot.slane %v1590, %v1596
        %v1598 = vcombine.low %v1572, %v1573
        %v1600 = vunpack.c.l.s4 1983009808
        %v1601 = vunpack.c.0.s8 %v1600
        %v1602 = vlaneseq
        %v1603 = vshrl.u32 %v1602, 7
        %v1604 = vsub.s32 %v1601, %v1603
        %v1605 = vrot.slane %v1598, %v1604
        %v1606 = vcombine.low %v1581, %v1589
        %v1607 = vcombine.high %v1581, %v1589
        %v1609 = vunpack.c.l.s4 1934713408
        %v1610 = vunpack.c.0.s8 %v1609
        %v1611 = vlaneseq
        %v1612 = vshrl.u32 %v1611, 7
        %v1613 = vsub.s32 %v1610, %v1612
        %v1614 = vrot.slane %v1606, %v1613
        %v1616 = vunpack.c.l.s4 1934713408
        %v1617 = vunpack.c.0.s8 %v1616
        %v1618 = vlaneseq
        %v1619 = vshrl.u32 %v1618, 7
        %v1620 = vsub.s32 %v1617, %v1619
        %v1621 = vrot.slane %v1607, %v1620
        %v1622 = vcombine.low %v1597, %v1605
        %v1623 = vcombine.high %v1597, %v1605
        %v1625 = vunpack.c.l.s4 1934713408
        %v1626 = vunpack.c.0.s8 %v1625
        %v1627 = vlaneseq
        %v1628 = vshrl.u32 %v1627, 7
        %v1629 = vsub.s32 %v1626, %v1628
        %v1630 = vrot.slane %v1622, %v1629
        %v1632 = vunpack.c.l.s4 1934713408
        %v1633 = vunpack.c.0.s8 %v1632
        %v1634 = vlaneseq
        %v1635 = vshrl.u32 %v1634, 7
        %v1636 = vsub.s32 %v1633, %v1635
        %v1637 = vrot.slane %v1623, %v1636
        %v1638 = vcombine.low %v1614, %v1630
        %v1639 = vcombine.high %v1614, %v1630
        %v1640 = vcombine.low %v1621, %v1637
        %v1641 = vcombine.high %v1621, %v1637
        %1643 = vrot.lane.b32.xlu0 %v1639, 8
        %v1644 = vpop.permute.xlu0 %1643
        %1647 = vrot.lane.b32.xlu0 %v1640, 16
        %v1648 = vpop.permute.xlu0 %1647
        %1651 = vrot.lane.b32.xlu0 %v1641, 24
        %v1652 = vpop.permute.xlu0 %1651
        %v1654 = vsel %vm1088, %v1638, %v1644
        %vm1655 = vcmask 130048
        %v1656 = vsel %vm1655, %v1654, %v1648
        %vm1657 = vcmask 195584
        %v1658 = vsel %vm1657, %v1656, %v1652
        %v1659 = vpack.c.bf16 %v1658, %v1658
        %v1660 = vld [vmem:[#allocation10] sm:$0xf]
        %v1661 = vld [vmem:[#allocation10 + $0x4] sm:$0xf]
        %v1662 = vld [vmem:[#allocation10 + $0x8] sm:$0xf]
        %v1663 = vld [vmem:[#allocation10 + $0xc] sm:$0xf]
        %v1668 = vunpack.c.l.b16 %v1660
        %v1669 = vunpack.c.l.b16 %v1661
        %v1670 = vunpack.c.l.b16 %v1662
        %v1671 = vunpack.c.l.b16 %v1663
        %v1672 = vpack.c.b16 %v1669, %v1668
        %v1673 = vpack.c.b16 %v1671, %v1670
        %v1677 = vsel %vm539, %v1659, 0
        %1679 = vmatprep.subr.bf16.mxu0 0
        %1680 = vmatpush1.bf16.msra.mxu0 %v1672
        %1681 = vmatprep.subr.bf16.mxu0 0
        %1682 = vmatpush1.bf16.msra.mxu0 %v1673
        %1683 = vmatprep.subr.bf16.mxu0 0
        %1684 = vmatpush1.bf16.msra.mxu0 0
        %1685 = vmatprep.subr.bf16.mxu0 0
        %1686 = vmatpush1.bf16.msra.mxu0 0
        %1687 = vmatprep.subr.bf16.mxu0 0
        %1688 = vmatpush1.bf16.msra.mxu0 0
        %1689 = vmatprep.subr.bf16.mxu0 0
        %1690 = vmatpush1.bf16.msra.mxu0 0
        %1691 = vmatprep.subr.bf16.mxu0 0
        %1692 = vmatpush1.bf16.msra.mxu0 0
        %1693 = vmatprep.subr.bf16.mxu0 0
        %1694 = vmatpush1.bf16.msra.mxu0 0
        %1695 = vmatprep.subr.bf16.mxu0 0
        %1696 = vmatpush1.bf16.msra.mxu0 0
        %1697 = vmatprep.subr.bf16.mxu0 0
        %1698 = vmatpush1.bf16.msra.mxu0 0
        %1699 = vmatprep.subr.bf16.mxu0 0
        %1700 = vmatpush1.bf16.msra.mxu0 0
        %1701 = vmatprep.subr.bf16.mxu0 0
        %1702 = vmatpush1.bf16.msra.mxu0 0
        %1703 = vmatprep.subr.bf16.mxu0 0
        %1704 = vmatpush1.bf16.msra.mxu0 0
        %1705 = vmatprep.subr.bf16.mxu0 0
        %1706 = vmatpush1.bf16.msra.mxu0 0
        %1707 = vmatprep.subr.bf16.mxu0 0
        %1708 = vmatpush1.bf16.msra.mxu0 0
        %1709 = vmatprep.subr.bf16.mxu0 0
        %1710 = vmatpush1.bf16.msra.mxu0 0
        %1711 = vmatprep.mubr.bf16.mxu0 0
        %1712 = vmatmul.mubr.bf16.gmra.mrb[0].mxu0 %v1677
        %v1713 = vpop.f32.mrb[0].mxu0
        %v1714 = vadd.f32 %v536, %v1713
        %v1715 = vpop.f32.mrb[0].mxu0
        %v1716 = vpop.f32.mrb[0].mxu0
        %v1717 = vpop.f32.mrb[0].mxu0
        %1718 = vdwg.mxu0
        %v1719 = vld [vmem:[#allocation11] sm:$0x1]
        %v1720 = vld [vmem:[#allocation13] sm:$0x1]
        %v1721 = vsel %vm539, %v1714, 0.0
        %1722 = vadd.xlane.f32.xlu0 %v1721
        %v1723 = vpop.xlane.xlu0 %1722
        %v1724 = vmul.f32 %v1723, %v543
        %v1725 = vsub.f32 %v1714, %v1724
        %v1726 = vmul.f32 %v1725, %v1725
        %v1727 = vsel %vm539, %v1726, 0.0
        %1728 = vadd.xlane.f32.xlu0 %v1727
        %v1729 = vpop.xlane.xlu0 %1728
        %v1730 = vmul.f32 %v1729, %v543
        %v1731 = vadd.f32 %v1730, 1e-05
        %v1732 = vrsqrt.pop %v1731
        %v1733 = vmul.f32 %v1725, %v1732
        %v1735 = vlaneseq
        %v1736 = vshrl.u32 %v1735, 7
        %v1737 = vsub.s32 0, %v1736
        %v1738 = vrot.slane %v1719, %v1737
        %v1740 = vmul.f32 %v1733, %v1738
        %v1742 = vlaneseq
        %v1743 = vshrl.u32 %v1742, 7
        %v1744 = vsub.s32 0, %v1743
        %v1745 = vrot.slane %v1720, %v1744
        %v1747 = vadd.f32 %v1740, %v1745
        %v1748 = vpack.c.bf16 %v1747, %v1747
        %v1749 = vld [vmem:[#allocation14] sm:$0xf]
        %v1750 = vld [vmem:[#allocation14 + $0x4] sm:$0xf]
        %v1751 = vld [vmem:[#allocation14 + $0x8] sm:$0xf]
        %v1752 = vld [vmem:[#allocation14 + $0xc] sm:$0xf]
        %v1753 = vld [vmem:[#allocation16] sm:$0x1]
        %v1755 = vlaneseq
        %v1756 = vshrl.u32 %v1755, 7
        %v1757 = vsub.s32 0, %v1756
        %v1758 = vrot.slane %v1753, %v1757
        %v1764 = vunpack.c.l.b16 %v1749
        %v1765 = vunpack.c.l.b16 %v1750
        %v1766 = vunpack.c.l.b16 %v1751
        %v1767 = vunpack.c.l.b16 %v1752
        %v1768 = vpack.c.b16 %v1765, %v1764
        %v1769 = vpack.c.b16 %v1767, %v1766
        %v1773 = vsel %vm539, %v1748, 0
        %1775 = vmatprep.subr.bf16.mxu0 0
        %1776 = vmatpush1.bf16.msra.mxu0 %v1768
        %1777 = vmatprep.subr.bf16.mxu0 0
        %1778 = vmatpush1.bf16.msra.mxu0 %v1769
        %1779 = vmatprep.subr.bf16.mxu0 0
        %1780 = vmatpush1.bf16.msra.mxu0 0
        %1781 = vmatprep.subr.bf16.mxu0 0
        %1782 = vmatpush1.bf16.msra.mxu0 0
        %1783 = vmatprep.subr.bf16.mxu0 0
        %1784 = vmatpush1.bf16.msra.mxu0 0
        %1785 = vmatprep.subr.bf16.mxu0 0
        %1786 = vmatpush1.bf16.msra.mxu0 0
        %1787 = vmatprep.subr.bf16.mxu0 0
        %1788 = vmatpush1.bf16.msra.mxu0 0
        %1789 = vmatprep.subr.bf16.mxu0 0
        %1790 = vmatpush1.bf16.msra.mxu0 0
        %1791 = vmatprep.subr.bf16.mxu0 0
        %1792 = vmatpush1.bf16.msra.mxu0 0
        %1793 = vmatprep.subr.bf16.mxu0 0
        %1794 = vmatpush1.bf16.msra.mxu0 0
        %1795 = vmatprep.subr.bf16.mxu0 0
        %1796 = vmatpush1.bf16.msra.mxu0 0
        %1797 = vmatprep.subr.bf16.mxu0 0
        %1798 = vmatpush1.bf16.msra.mxu0 0
        %1799 = vmatprep.subr.bf16.mxu0 0
        %1800 = vmatpush1.bf16.msra.mxu0 0
        %1801 = vmatprep.subr.bf16.mxu0 0
        %1802 = vmatpush1.bf16.msra.mxu0 0
        %1803 = vmatprep.subr.bf16.mxu0 0
        %1804 = vmatpush1.bf16.msra.mxu0 0
        %1805 = vmatprep.subr.bf16.mxu0 0
        %1806 = vmatpush1.bf16.msra.mxu0 0
        %1807 = vmatprep.mubr.bf16.mxu0 0
        %1808 = vmatmul.mubr.bf16.gmra.mrb[0].mxu0 %v1773
        %v1809 = vpop.f32.mrb[0].mxu0
        %v1810 = vadd.f32 %v1758, %v1809
        %v1811 = vpop.f32.mrb[0].mxu0
        %v1812 = vpop.f32.mrb[0].mxu0
        %v1813 = vpop.f32.mrb[0].mxu0
        %1814 = vdwg.mxu0
        %v1815 = vmax.f32 %v1810, 0.0
        %v1816 = vpack.c.bf16 %v1815, %v1815
        %v1817 = vld [vmem:[#allocation17] sm:$0xf]
        %v1818 = vld [vmem:[#allocation17 + $0x4] sm:$0xf]
        %v1819 = vld [vmem:[#allocation17 + $0x8] sm:$0xf]
        %v1820 = vld [vmem:[#allocation17 + $0xc] sm:$0xf]
        %v1821 = vld [vmem:[#allocation17 + $0x10] sm:$0xf]
        %v1822 = vld [vmem:[#allocation17 + $0x14] sm:$0xf]
        %v1823 = vld [vmem:[#allocation17 + $0x18] sm:$0xf]
        %v1824 = vld [vmem:[#allocation17 + $0x1c] sm:$0xf]
        %v1825 = vld [vmem:[#allocation17 + $0x20] sm:$0xf]
        %v1826 = vld [vmem:[#allocation17 + $0x24] sm:$0xf]
        %v1827 = vld [vmem:[#allocation17 + $0x28] sm:$0xf]
        %v1828 = vld [vmem:[#allocation17 + $0x2c] sm:$0xf]
        %v1829 = vld [vmem:[#allocation17 + $0x30] sm:$0xf]
        %v1830 = vld [vmem:[#allocation17 + $0x34] sm:$0xf]
        %v1831 = vld [vmem:[#allocation17 + $0x38] sm:$0xf]
        %v1832 = vld [vmem:[#allocation17 + $0x3c] sm:$0xf]
        %v1833 = vld [vmem:[#allocation19] sm:$0x1]
        %v1835 = vlaneseq
        %v1836 = vshrl.u32 %v1835, 7
        %v1837 = vsub.s32 0, %v1836
        %v1838 = vrot.slane %v1833, %v1837
        %v1856 = vunpack.c.l.b16 %v1817
        %v1857 = vunpack.c.l.b16 %v1818
        %v1858 = vunpack.c.l.b16 %v1819
        %v1859 = vunpack.c.l.b16 %v1820
        %v1860 = vunpack.c.l.b16 %v1821
        %v1861 = vunpack.c.l.b16 %v1822
        %v1862 = vunpack.c.l.b16 %v1823
        %v1863 = vunpack.c.l.b16 %v1824
        %v1864 = vunpack.c.l.b16 %v1825
        %v1865 = vunpack.c.l.b16 %v1826
        %v1866 = vunpack.c.l.b16 %v1827
        %v1867 = vunpack.c.l.b16 %v1828
        %v1868 = vunpack.c.l.b16 %v1829
        %v1869 = vunpack.c.l.b16 %v1830
        %v1870 = vunpack.c.l.b16 %v1831
        %v1871 = vunpack.c.l.b16 %v1832
        %v1872 = vpack.c.b16 %v1857, %v1856
        %v1873 = vpack.c.b16 %v1859, %v1858
        %v1874 = vpack.c.b16 %v1861, %v1860
        %v1875 = vpack.c.b16 %v1863, %v1862
        %v1876 = vpack.c.b16 %v1865, %v1864
        %v1877 = vpack.c.b16 %v1867, %v1866
        %v1878 = vpack.c.b16 %v1869, %v1868
        %v1879 = vpack.c.b16 %v1871, %v1870
        %1888 = vmatprep.subr.bf16.mxu0 0
        %1889 = vmatpush1.bf16.msra.mxu0 %v1872
        %1890 = vmatprep.subr.bf16.mxu0 0
        %1891 = vmatpush1.bf16.msra.mxu0 %v1873
        %1892 = vmatprep.subr.bf16.mxu0 0
        %1893 = vmatpush1.bf16.msra.mxu0 %v1874
        %1894 = vmatprep.subr.bf16.mxu0 0
        %1895 = vmatpush1.bf16.msra.mxu0 %v1875
        %1896 = vmatprep.subr.bf16.mxu0 0
        %1897 = vmatpush1.bf16.msra.mxu0 %v1876
        %1898 = vmatprep.subr.bf16.mxu0 0
        %1899 = vmatpush1.bf16.msra.mxu0 %v1877
        %1900 = vmatprep.subr.bf16.mxu0 0
        %1901 = vmatpush1.bf16.msra.mxu0 %v1878
        %1902 = vmatprep.subr.bf16.mxu0 0
        %1903 = vmatpush1.bf16.msra.mxu0 %v1879
        %1904 = vmatprep.subr.bf16.mxu0 0
        %1905 = vmatpush1.bf16.msra.mxu0 0
        %1906 = vmatprep.subr.bf16.mxu0 0
        %1907 = vmatpush1.bf16.msra.mxu0 0
        %1908 = vmatprep.subr.bf16.mxu0 0
        %1909 = vmatpush1.bf16.msra.mxu0 0
        %1910 = vmatprep.subr.bf16.mxu0 0
        %1911 = vmatpush1.bf16.msra.mxu0 0
        %1912 = vmatprep.subr.bf16.mxu0 0
        %1913 = vmatpush1.bf16.msra.mxu0 0
        %1914 = vmatprep.subr.bf16.mxu0 0
        %1915 = vmatpush1.bf16.msra.mxu0 0
        %1916 = vmatprep.subr.bf16.mxu0 0
        %1917 = vmatpush1.bf16.msra.mxu0 0
        %1918 = vmatprep.subr.bf16.mxu0 0
        %1919 = vmatpush1.bf16.msra.mxu0 0
        %1920 = vmatprep.mubr.bf16.mxu0 0
        %1921 = vmatmul.mubr.bf16.gmra.mrb[0].mxu0 %v1816
        %v1922 = vpop.f32.mrb[0].mxu0
        %v1923 = vadd.f32 %v1838, %v1922
        %v1924 = vpop.f32.mrb[0].mxu0
        %v1925 = vpop.f32.mrb[0].mxu0
        %v1926 = vpop.f32.mrb[0].mxu0
        %1927 = vdwg.mxu0
        %v1928 = vadd.f32 %v1923, %v1714
        %1929 = vst.msk [vmem:[%s534] sm:$0xff] %vm539, %v1928
        %s1930 = sand.u32 %s277, 1
        %s1931 = scalar_lea.sflag [#allocation4], %s1930
        %s1932 = sand.u32 %s277, 1
        %s1933 = smul.addr %s1932, 8
        %s1934 = scalar_lea.vmem [#allocation20], %s1933
        // Predicated region
        $region109: #{tpu_custom_call.1} parent=63 // pred_check
          %p1935 = pneg %p287
        $region110: #{tpu_custom_call.1} parent=63 // pred_check_branch
          %1937 = sbr.rel (%p1935) target = $region112
        $region111: #{tpu_custom_call.1} parent=63 // pred_region
          %s1939 = ssub.s32 128, 128
          %1940 = vsyncadd %s1931, %s1939
          %s1941 = smul.addr %s33, 128
          %s1942 = scalar_lea.hbm %s11, %s1941
          %s1944 = sshll.u32 %s1934, 4
          %s1945 = int_to_ptr.vmem [resolvable:$true] %s1944
          %1947 = dma.vmem_to_hbm [thread:$0]  %s1945, 128, %s1942, %s1931
        $region112: #{tpu_custom_call.1} parent=63 // pred_fallthru
          _
      $region64: #{tpu_custom_call.1} parent=5 // pred_fallthru
        _
      %p1948 = scmp.le.s32.totalorder 2, %s28
      // Predicated region
      $region113: #{tpu_custom_call.1} parent=5 // pred_check
        %p1949 = pneg %p1948
      $region114: #{tpu_custom_call.1} parent=5 // pred_check_branch
        %1951 = sbr.rel (%p1949) target = $region116
      $region115: #{tpu_custom_call.1} parent=5 // pred_region
        %s1952 = ssub.s32 %s28, 2
        // Predicated region
        $region117: #{tpu_custom_call.1} parent=115 // pred_check
          %p1953 = pneg %p293
        $region118: #{tpu_custom_call.1} parent=115 // pred_check_branch
          %1955 = sbr.rel (%p1953) target = $region120
        $region119: #{tpu_custom_call.1} parent=115 // pred_region
          %s1956 = sand.u32 %s278, 1
          %s1957 = scalar_lea.sflag [#allocation4], %s1956
          %s1958 = sand.u32 %s278, 1
          %s1959 = smul.addr %s1958, 8
          %s1960 = scalar_lea.vmem [#allocation20], %s1959
          %1961 = dma.done %s1957, 128
        $region120: #{tpu_custom_call.1} parent=115 // pred_fallthru
          _
      $region116: #{tpu_custom_call.1} parent=5 // pred_fallthru
        _
    $region6: #{tpu_custom_call.1} parent=1 // loop_footer
      %s32 = sadd.s32 1, %s28
    $region7: #{tpu_custom_call.1} parent=1 // loop_footer_branch
      %27 = sbr.rel target = $region3
    $region8: #{tpu_custom_call.1} parent=1 // loop_exit
      _
    %1962 = vsyncpa [#allocation3], 1
    %s1963 = scalar_lea.sflag [#allocation3], 1
    %1964 = vsyncpa %s1963, 1
    %1965 = vsyncpa [#allocation6], 1
    %1966 = vsyncpa [#allocation9], 1
    %1967 = vsyncpa [#allocation12], 1
    %1968 = vsyncpa [#allocation15], 1
    %1969 = vsyncpa [#allocation18], 1
    %1970 = vsyncpa [#allocation4], 1
    %s1971 = scalar_lea.sflag [#allocation4], 1
    %1972 = vsyncpa %s1971, 1

</llo_original>
